<compile_context>
chip_gen: v6e
topology: v6e:2x2x1
jax: 0.10.0
libtpu: 0.0.40
codegen_flags: <defaults>
</compile_context>

<pallas_src>
import functools

import jax
import jax.numpy as jnp
from jax.experimental import pallas as pl
from jax.experimental.pallas import tpu as pltpu  # imported per kernel conventions

# ---- model hyperparameters (small, deterministic) ----
SEQ = 8
BATCH = 2
D_MODEL = 32
NHEAD = 4
DIM_FF = 64
EPS = 1e-5
NEG_INF = -1e30


def encoder_layer_kernel(x_ref, p_ref, o_ref, *, nhead, d_ff, eps):
    # x: (N, D) with N = S*B, rows ordered (s, b) exactly as src.reshape(S*B, D).
    x = x_ref[...]
    N, D = x.shape
    Dh = D // nhead
    FF = d_ff
    scale = 1.0 / (Dh ** 0.5)

    # ---- packed parameter windows (all static slices into ONE buffer) ----
    # rows [0,3D): Wqkv (cols 0:D) + bqkv column (col D)      (torch (out,in) layout)
    # rows [3D,4D): Wo                                          (torch layout)
    # rows [4D,5D): W1.T   rows [5D,5D+FF): W2.T                (for natural-orient FFN)
    # rows [5D+FF, +7): bo, b1, b2, g1, be1, g2, be2 as row vectors
    # rows [5D+FF+8, +N): additive same-batch attention mask (0 / -1e30)
    w_qkv = p_ref[0:3 * D, 0:D]                       # (3D, D)
    b_qkv = p_ref[0:3 * D, D:D + 1]                   # (3D, 1) column bias
    w_o = p_ref[3 * D:4 * D, 0:D]                     # (D, D)
    w_1t = p_ref[4 * D:5 * D, 0:FF]                   # (D, FF)
    w_2t = p_ref[5 * D:5 * D + FF, 0:D]               # (FF, D)
    vr = 5 * D + FF
    b_o = p_ref[vr + 0:vr + 1, 0:D]
    b_1 = p_ref[vr + 1:vr + 2, 0:FF]
    b_2 = p_ref[vr + 2:vr + 3, 0:D]
    g_1 = p_ref[vr + 3:vr + 4, 0:D]
    be_1 = p_ref[vr + 4:vr + 5, 0:D]
    g_2 = p_ref[vr + 5:vr + 6, 0:D]
    be_2 = p_ref[vr + 6:vr + 7, 0:D]
    neg_mask = p_ref[vr + 8:vr + 8 + N, 0:N]          # (N, N)

    # ---- fused QKV projection, computed transposed: (3D, N) ----
    xT = x.T                                          # (D, N) - one 2D XLU transpose
    qkvT = jnp.dot(w_qkv, xT, preferred_element_type=jnp.float32) + b_qkv

    # Heads live on 8-row slabs of qkvT, so K/V head grouping is a FREE reshape.
    kg = qkvT[D:2 * D, :].reshape(nhead, Dh, N)       # (H, Dh, N)
    vg = qkvT[2 * D:3 * D, :].reshape(nhead, Dh, N)   # (H, Dh, N)
    # Q needs tokens on the sublane axis per head: one 2D transpose + H lane slices.
    q = qkvT[0:D, :].T                                # (N, D)
    qg = jnp.concatenate(
        [q[:, h * Dh:(h + 1) * Dh].reshape(1, N, Dh) for h in range(nhead)],
        axis=0)                                       # (H, N, Dh)

    # ---- attention over the full (s,b)-ordered token axis, masked per batch ----
    # Both einsums use the proven single-batch-dim dot_general forms.
    s = jnp.einsum('hnd,hdm->hnm', qg, kg,
                   preferred_element_type=jnp.float32) * scale   # (H, N, N)
    s = s + neg_mask                                   # broadcast over heads
    m = jnp.max(s, axis=-1, keepdims=True)
    p = jnp.exp(s - m)                                 # masked entries underflow to 0
    l = jnp.sum(p, axis=-1, keepdims=True)
    p = p * pl.reciprocal(l)                           # approx=False keeps 1e-4 parity
    ctxT = jnp.einsum('hdm,hnm->hdn', vg, p,
                      preferred_element_type=jnp.float32)         # (H, Dh, N)
    ctxT = ctxT.reshape(D, N)                          # heads merge on rows for free

    attn = jnp.dot(w_o, ctxT, preferred_element_type=jnp.float32).T + b_o   # (N, D)

    # ---- residual + LayerNorm1 (natural orientation, reductions over lanes) ----
    y = x + attn
    mu = jnp.mean(y, axis=-1, keepdims=True)
    var = jnp.mean((y - mu) ** 2, axis=-1, keepdims=True)
    y = (y - mu) * jax.lax.rsqrt(var + eps) * g_1 + be_1

    # ---- feed-forward: linear1 -> relu -> linear2 ----
    h1 = jnp.dot(y, w_1t, preferred_element_type=jnp.float32) + b_1
    h1 = jnp.maximum(h1, 0.0)
    ff = jnp.dot(h1, w_2t, preferred_element_type=jnp.float32) + b_2

    # ---- residual + LayerNorm2 ----
    z = y + ff
    mu2 = jnp.mean(z, axis=-1, keepdims=True)
    var2 = jnp.mean((z - mu2) ** 2, axis=-1, keepdims=True)
    z = (z - mu2) * jax.lax.rsqrt(var2 + eps) * g_2 + be_2

    o_ref[...] = z.astype(o_ref.dtype)


def prepare_params(p, *, seq=SEQ, batch=BATCH):
    """One-time layout prep: pack ALL parameters + attention mask into one buffer."""
    D, FF = D_MODEL, DIM_FF
    N = seq * batch
    width = max(FF, D + 1)
    vr = 5 * D + FF
    rows = vr + 8 + N

    buf = jnp.zeros((rows, width), jnp.float32)
    buf = buf.at[0:3 * D, 0:D].set(p["wqkv"].astype(jnp.float32))
    buf = buf.at[0:3 * D, D].set(p["bqkv"].reshape(-1).astype(jnp.float32))
    buf = buf.at[3 * D:4 * D, 0:D].set(p["wo"].astype(jnp.float32))
    buf = buf.at[4 * D:5 * D, 0:FF].set(p["w1"].T.astype(jnp.float32))
    buf = buf.at[5 * D:5 * D + FF, 0:D].set(p["w2"].T.astype(jnp.float32))
    buf = buf.at[vr + 0, 0:D].set(p["bo"].reshape(-1).astype(jnp.float32))
    buf = buf.at[vr + 1, 0:FF].set(p["b1"].reshape(-1).astype(jnp.float32))
    buf = buf.at[vr + 2, 0:D].set(p["b2"].reshape(-1).astype(jnp.float32))
    buf = buf.at[vr + 3, 0:D].set(p["g1"].reshape(-1).astype(jnp.float32))
    buf = buf.at[vr + 4, 0:D].set(p["be1"].reshape(-1).astype(jnp.float32))
    buf = buf.at[vr + 5, 0:D].set(p["g2"].reshape(-1).astype(jnp.float32))
    buf = buf.at[vr + 6, 0:D].set(p["be2"].reshape(-1).astype(jnp.float32))

    # Additive attention mask for token order n = s*batch + b: only same-batch pairs.
    bid = jnp.arange(N, dtype=jnp.int32) % batch
    same = bid[:, None] == bid[None, :]
    buf = buf.at[vr + 8:vr + 8 + N, 0:N].set(
        jnp.where(same, 0.0, NEG_INF).astype(jnp.float32))
    return buf


@jax.jit
def transformer_encoder_layer(src, ppack):
    """src: (seq, batch, d_model) float32 (batch_first=False convention)."""
    S, B, D = src.shape
    # Free views only - no XLA transpose dispatches bracketing the kernel.
    x2 = src.reshape(S * B, D)                        # rows in (s, b) order
    kernel = functools.partial(encoder_layer_kernel, nhead=NHEAD, d_ff=DIM_FF, eps=EPS)

    # Single invocation (grid=()): every operand is a full-array VMEM block (~60 KB),
    # far under any scoped VMEM limit on v5e/v6e/v7x.
    out = pl.pallas_call(
        kernel,
        out_shape=jax.ShapeDtypeStruct((S * B, D), src.dtype),
    )(x2, ppack)

    return out.reshape(S, B, D)


def make_params(key):
    """Deterministic parameter init (shapes match nn.TransformerEncoderLayer)."""
    ks = jax.random.split(key, 8)

    def xavier(k, shape):
        fan_in, fan_out = shape[1], shape[0]
        lim = (6.0 / (fan_in + fan_out)) ** 0.5
        return jax.random.uniform(k, shape, jnp.float32, -lim, lim)

    D, FF = D_MODEL, DIM_FF
    return {
        "wqkv": xavier(ks[0], (3 * D, D)),
        "bqkv": jnp.zeros((1, 3 * D), jnp.float32),
        "wo":   xavier(ks[1], (D, D)),
        "bo":   jnp.zeros((1, D), jnp.float32),
        "w1":   xavier(ks[2], (FF, D)),
        "b1":   (0.01 * jax.random.normal(ks[3], (1, FF))).astype(jnp.float32),
        "w2":   xavier(ks[4], (D, FF)),
        "b2":   (0.01 * jax.random.normal(ks[5], (1, D))).astype(jnp.float32),
        "g1":   jnp.ones((1, D), jnp.float32),
        "be1":  jnp.zeros((1, D), jnp.float32),
        "g2":   jnp.ones((1, D), jnp.float32),
        "be2":  jnp.zeros((1, D), jnp.float32),
    }


def reference_forward(src, p):
    """Pure-JAX reference mirroring PyTorch semantics (eval mode)."""
    S, B, D = src.shape
    H, Dh = NHEAD, D // NHEAD
    x = jnp.transpose(src, (1, 0, 2))                 # (B, S, D)
    qkv = jnp.einsum("bsd,ed->bse", x, p["wqkv"]) + p["bqkv"][0]
    q, k, v = jnp.split(qkv, 3, axis=-1)
    q = q.reshape(B, S, H, Dh).transpose(0, 2, 1, 3)
    k = k.reshape(B, S, H, Dh).transpose(0, 2, 1, 3)
    v = v.reshape(B, S, H, Dh).transpose(0, 2, 1, 3)
    scores = jnp.einsum("bhqd,bhkd->bhqk", q, k) / (Dh ** 0.5)
    attn_w = jax.nn.softmax(scores, axis=-1)
    ctx = jnp.einsum("bhqk,bhkd->bhqd", attn_w, v).transpose(0, 2, 1, 3).reshape(B, S, D)
    attn = jnp.einsum("bsd,ed->bse", ctx, p["wo"]) + p["bo"][0]

    def ln(t, g, b):
        mu = jnp.mean(t, axis=-1, keepdims=True)
        var = jnp.mean((t - mu) ** 2, axis=-1, keepdims=True)
        return (t - mu) / jnp.sqrt(var + EPS) * g[0] + b[0]

    y = ln(x + attn, p["g1"], p["be1"])
    h = jax.nn.relu(jnp.einsum("bsd,fd->bsf", y, p["w1"]) + p["b1"][0])
    ff = jnp.einsum("bsf,df->bsd", h, p["w2"]) + p["b2"][0]
    z = ln(y + ff, p["g2"], p["be2"])
    return jnp.transpose(z, (1, 0, 2))


if __name__ == "__main__":
    key = jax.random.PRNGKey(0)
    k_src, k_par = jax.random.split(key)
    src = jax.random.normal(k_src, (SEQ, BATCH, D_MODEL), jnp.float32)
    params = make_params(k_par)
    ppack = prepare_params(params)        # one-time layout prep (pack + pre-transpose)

    out = transformer_encoder_layer(src, ppack)
    out = jax.block_until_ready(out)

    ref = reference_forward(src, params)
    assert out.shape == (SEQ, BATCH, D_MODEL)
    assert jnp.allclose(out, ref, rtol=1e-4, atol=1e-4), "mismatch vs reference"
    print("KERNEL_OK")
</pallas_src>

<mosaic_0001>
module attributes {stable_mosaic.version = 11 : i64} {
  func.func @encoder_layer_kernel(%arg0: memref<16x32xf32, #tpu.memory_space<vmem>>, %arg1: memref<248x64xf32, #tpu.memory_space<vmem>>, %arg2: memref<16x32xf32, #tpu.memory_space<vmem>>) attributes {dimension_semantics = [], scalar_prefetch = 0 : i64, scratch_operands = 0 : i64, tpu.core_type = #tpu.core_type<tc>} {
    %c0 = arith.constant 0 : index
    %c0_0 = arith.constant 0 : index
    %0 = vector.load %arg0[%c0, %c0_0] : memref<16x32xf32, #tpu.memory_space<vmem>>, vector<16x32xf32>
    %c0_1 = arith.constant 0 : index
    %c0_2 = arith.constant 0 : index
    %1 = vector.load %arg1[%c0_1, %c0_2] : memref<248x64xf32, #tpu.memory_space<vmem>>, vector<96x32xf32>
    %c0_3 = arith.constant 0 : index
    %c32 = arith.constant 32 : index
    %2 = vector.load %arg1[%c0_3, %c32] : memref<248x64xf32, #tpu.memory_space<vmem>>, vector<96x1xf32>
    %c96 = arith.constant 96 : index
    %c0_4 = arith.constant 0 : index
    %3 = vector.load %arg1[%c96, %c0_4] : memref<248x64xf32, #tpu.memory_space<vmem>>, vector<32x32xf32>
    %c128 = arith.constant 128 : index
    %c0_5 = arith.constant 0 : index
    %4 = vector.load %arg1[%c128, %c0_5] : memref<248x64xf32, #tpu.memory_space<vmem>>, vector<32x64xf32>
    %c160 = arith.constant 160 : index
    %c0_6 = arith.constant 0 : index
    %5 = vector.load %arg1[%c160, %c0_6] : memref<248x64xf32, #tpu.memory_space<vmem>>, vector<64x32xf32>
    %c224 = arith.constant 224 : index
    %c0_7 = arith.constant 0 : index
    %6 = vector.load %arg1[%c224, %c0_7] : memref<248x64xf32, #tpu.memory_space<vmem>>, vector<1x32xf32>
    %c225 = arith.constant 225 : index
    %c0_8 = arith.constant 0 : index
    %7 = vector.load %arg1[%c225, %c0_8] : memref<248x64xf32, #tpu.memory_space<vmem>>, vector<1x64xf32>
    %c226 = arith.constant 226 : index
    %c0_9 = arith.constant 0 : index
    %8 = vector.load %arg1[%c226, %c0_9] : memref<248x64xf32, #tpu.memory_space<vmem>>, vector<1x32xf32>
    %c227 = arith.constant 227 : index
    %c0_10 = arith.constant 0 : index
    %9 = vector.load %arg1[%c227, %c0_10] : memref<248x64xf32, #tpu.memory_space<vmem>>, vector<1x32xf32>
    %c228 = arith.constant 228 : index
    %c0_11 = arith.constant 0 : index
    %10 = vector.load %arg1[%c228, %c0_11] : memref<248x64xf32, #tpu.memory_space<vmem>>, vector<1x32xf32>
    %c229 = arith.constant 229 : index
    %c0_12 = arith.constant 0 : index
    %11 = vector.load %arg1[%c229, %c0_12] : memref<248x64xf32, #tpu.memory_space<vmem>>, vector<1x32xf32>
    %c230 = arith.constant 230 : index
    %c0_13 = arith.constant 0 : index
    %12 = vector.load %arg1[%c230, %c0_13] : memref<248x64xf32, #tpu.memory_space<vmem>>, vector<1x32xf32>
    %c232 = arith.constant 232 : index
    %c0_14 = arith.constant 0 : index
    %13 = vector.load %arg1[%c232, %c0_14] : memref<248x64xf32, #tpu.memory_space<vmem>>, vector<16x16xf32>
    %14 = tpu.transpose %0, [1, 0] : vector<16x32xf32> -> vector<32x16xf32>
    %cst = arith.constant dense<0.000000e+00> : vector<96x16xf32>
    %15 = tpu.matmul %1, %14, %cst {dimension_numbers = #tpu.dot_dimension_numbers<[1], [0], [0], [1], [0, 0, 1, 1], [], []>} : vector<96x32xf32>, vector<32x16xf32>, vector<96x16xf32> -> vector<96x16xf32>
    %16 = vector.broadcast %2 : vector<96x1xf32> to vector<96x16xf32>
    %17 = arith.addf %15, %16 : vector<96x16xf32>
    %18 = vector.extract_strided_slice %17 {offsets = [32, 0], sizes = [32, 16], strides = [1, 1]} : vector<96x16xf32> to vector<32x16xf32>
    %19 = vector.shape_cast %18 : vector<32x16xf32> to vector<4x8x16xf32>
    %20 = vector.extract_strided_slice %17 {offsets = [64, 0], sizes = [32, 16], strides = [1, 1]} : vector<96x16xf32> to vector<32x16xf32>
    %21 = vector.shape_cast %20 : vector<32x16xf32> to vector<4x8x16xf32>
    %22 = vector.extract_strided_slice %17 {offsets = [0, 0], sizes = [32, 16], strides = [1, 1]} : vector<96x16xf32> to vector<32x16xf32>
    %23 = tpu.transpose %22, [1, 0] : vector<32x16xf32> -> vector<16x32xf32>
    %24 = vector.extract_strided_slice %23 {offsets = [0, 0], sizes = [16, 8], strides = [1, 1]} : vector<16x32xf32> to vector<16x8xf32>
    %25 = vector.shape_cast %24 : vector<16x8xf32> to vector<1x16x8xf32>
    %26 = vector.extract_strided_slice %23 {offsets = [0, 8], sizes = [16, 8], strides = [1, 1]} : vector<16x32xf32> to vector<16x8xf32>
    %27 = vector.shape_cast %26 : vector<16x8xf32> to vector<1x16x8xf32>
    %28 = vector.extract_strided_slice %23 {offsets = [0, 16], sizes = [16, 8], strides = [1, 1]} : vector<16x32xf32> to vector<16x8xf32>
    %29 = vector.shape_cast %28 : vector<16x8xf32> to vector<1x16x8xf32>
    %30 = vector.extract_strided_slice %23 {offsets = [0, 24], sizes = [16, 8], strides = [1, 1]} : vector<16x32xf32> to vector<16x8xf32>
    %31 = vector.shape_cast %30 : vector<16x8xf32> to vector<1x16x8xf32>
    %32 = tpu.concatenate %25, %27, %29, %31 in 0 : vector<1x16x8xf32>, vector<1x16x8xf32>, vector<1x16x8xf32>, vector<1x16x8xf32> -> vector<4x16x8xf32>
    "tpu.trace_start"() <{level = 10 : i32, message = "hnd,hdm->hnm"}> : () -> ()
    %cst_15 = arith.constant dense<0.000000e+00> : vector<4x16x16xf32>
    %33 = tpu.matmul %32, %19, %cst_15 {dimension_numbers = #tpu.dot_dimension_numbers<[2], [1], [1], [2], [0, 0, 0, 1, 1, 2], [0], [0]>} : vector<4x16x8xf32>, vector<4x8x16xf32>, vector<4x16x16xf32> -> vector<4x16x16xf32>
    "tpu.trace_stop"() : () -> ()
    %cst_16 = arith.constant 0.353553385 : f32
    %34 = vector.broadcast %cst_16 : f32 to vector<4x16x16xf32>
    %35 = arith.mulf %33, %34 : vector<4x16x16xf32>
    %36 = vector.shape_cast %13 : vector<16x16xf32> to vector<1x16x16xf32>
    %37 = vector.broadcast %36 : vector<1x16x16xf32> to vector<4x16x16xf32>
    %38 = arith.addf %35, %37 : vector<4x16x16xf32>
    %cst_17 = arith.constant dense<0xFF800000> : vector<4x16xf32>
    %39 = vector.multi_reduction <maximumf>, %38, %cst_17 [2] : vector<4x16x16xf32> to vector<4x16xf32>
    %40 = vector.shape_cast %39 : vector<4x16xf32> to vector<4x16x1xf32>
    %41 = vector.broadcast %40 : vector<4x16x1xf32> to vector<4x16x16xf32>
    %42 = arith.subf %38, %41 : vector<4x16x16xf32>
    %43 = math.exp %42 : vector<4x16x16xf32>
    %cst_18 = arith.constant dense<0.000000e+00> : vector<4x16xf32>
    %44 = vector.multi_reduction <add>, %43, %cst_18 [2] : vector<4x16x16xf32> to vector<4x16xf32>
    %45 = vector.shape_cast %44 : vector<4x16xf32> to vector<4x16x1xf32>
    %46 = tpu.reciprocal %45 : vector<4x16x1xf32> -> vector<4x16x1xf32>
    %47 = vector.broadcast %46 : vector<4x16x1xf32> to vector<4x16x16xf32>
    %48 = arith.mulf %43, %47 : vector<4x16x16xf32>
    "tpu.trace_start"() <{level = 10 : i32, message = "hdm,hnm->hdn"}> : () -> ()
    %cst_19 = arith.constant dense<0.000000e+00> : vector<4x8x16xf32>
    %49 = tpu.matmul %21, %48, %cst_19 {dimension_numbers = #tpu.dot_dimension_numbers<[2], [2], [1], [1], [0, 0, 0, 1, 1, 1], [0], [0]>} : vector<4x8x16xf32>, vector<4x16x16xf32>, vector<4x8x16xf32> -> vector<4x8x16xf32>
    "tpu.trace_stop"() : () -> ()
    %50 = vector.shape_cast %49 : vector<4x8x16xf32> to vector<32x16xf32>
    %cst_20 = arith.constant dense<0.000000e+00> : vector<32x16xf32>
    %51 = tpu.matmul %3, %50, %cst_20 {dimension_numbers = #tpu.dot_dimension_numbers<[1], [0], [0], [1], [0, 0, 1, 1], [], []>} : vector<32x32xf32>, vector<32x16xf32>, vector<32x16xf32> -> vector<32x16xf32>
    %52 = tpu.transpose %51, [1, 0] : vector<32x16xf32> -> vector<16x32xf32>
    %53 = vector.broadcast %6 : vector<1x32xf32> to vector<16x32xf32>
    %54 = arith.addf %52, %53 : vector<16x32xf32>
    %55 = arith.addf %0, %54 : vector<16x32xf32>
    %cst_21 = arith.constant dense<0.000000e+00> : vector<16xf32>
    %56 = vector.multi_reduction <add>, %55, %cst_21 [1] : vector<16x32xf32> to vector<16xf32>
    %57 = vector.shape_cast %56 : vector<16xf32> to vector<16x1xf32>
    %cst_22 = arith.constant 3.200000e+01 : f32
    %58 = vector.broadcast %cst_22 : f32 to vector<16x1xf32>
    %59 = arith.divf %57, %58 : vector<16x1xf32>
    %60 = vector.broadcast %59 : vector<16x1xf32> to vector<16x32xf32>
    %61 = arith.subf %55, %60 : vector<16x32xf32>
    %62 = arith.mulf %61, %61 : vector<16x32xf32>
    %cst_23 = arith.constant dense<0.000000e+00> : vector<16xf32>
    %63 = vector.multi_reduction <add>, %62, %cst_23 [1] : vector<16x32xf32> to vector<16xf32>
    %64 = vector.shape_cast %63 : vector<16xf32> to vector<16x1xf32>
    %cst_24 = arith.constant 3.200000e+01 : f32
    %65 = vector.broadcast %cst_24 : f32 to vector<16x1xf32>
    %66 = arith.divf %64, %65 : vector<16x1xf32>
    %67 = vector.broadcast %59 : vector<16x1xf32> to vector<16x32xf32>
    %68 = arith.subf %55, %67 : vector<16x32xf32>
    %cst_25 = arith.constant 9.99999974E-6 : f32
    %69 = vector.broadcast %cst_25 : f32 to vector<16x1xf32>
    %70 = arith.addf %66, %69 : vector<16x1xf32>
    %71 = math.rsqrt %70 : vector<16x1xf32>
    %72 = vector.broadcast %71 : vector<16x1xf32> to vector<16x32xf32>
    %73 = arith.mulf %68, %72 : vector<16x32xf32>
    %74 = vector.broadcast %9 : vector<1x32xf32> to vector<16x32xf32>
    %75 = arith.mulf %73, %74 : vector<16x32xf32>
    %76 = vector.broadcast %10 : vector<1x32xf32> to vector<16x32xf32>
    %77 = arith.addf %75, %76 : vector<16x32xf32>
    %cst_26 = arith.constant dense<0.000000e+00> : vector<16x64xf32>
    %78 = tpu.matmul %77, %4, %cst_26 {dimension_numbers = #tpu.dot_dimension_numbers<[1], [0], [0], [1], [0, 0, 1, 1], [], []>} : vector<16x32xf32>, vector<32x64xf32>, vector<16x64xf32> -> vector<16x64xf32>
    %79 = vector.broadcast %7 : vector<1x64xf32> to vector<16x64xf32>
    %80 = arith.addf %78, %79 : vector<16x64xf32>
    %cst_27 = arith.constant 0.000000e+00 : f32
    %81 = vector.broadcast %cst_27 : f32 to vector<16x64xf32>
    %82 = arith.maximumf %80, %81 : vector<16x64xf32>
    %cst_28 = arith.constant dense<0.000000e+00> : vector<16x32xf32>
    %83 = tpu.matmul %82, %5, %cst_28 {dimension_numbers = #tpu.dot_dimension_numbers<[1], [0], [0], [1], [0, 0, 1, 1], [], []>} : vector<16x64xf32>, vector<64x32xf32>, vector<16x32xf32> -> vector<16x32xf32>
    %84 = vector.broadcast %8 : vector<1x32xf32> to vector<16x32xf32>
    %85 = arith.addf %83, %84 : vector<16x32xf32>
    %86 = arith.addf %77, %85 : vector<16x32xf32>
    %cst_29 = arith.constant dense<0.000000e+00> : vector<16xf32>
    %87 = vector.multi_reduction <add>, %86, %cst_29 [1] : vector<16x32xf32> to vector<16xf32>
    %88 = vector.shape_cast %87 : vector<16xf32> to vector<16x1xf32>
    %cst_30 = arith.constant 3.200000e+01 : f32
    %89 = vector.broadcast %cst_30 : f32 to vector<16x1xf32>
    %90 = arith.divf %88, %89 : vector<16x1xf32>
    %91 = vector.broadcast %90 : vector<16x1xf32> to vector<16x32xf32>
    %92 = arith.subf %86, %91 : vector<16x32xf32>
    %93 = arith.mulf %92, %92 : vector<16x32xf32>
    %cst_31 = arith.constant dense<0.000000e+00> : vector<16xf32>
    %94 = vector.multi_reduction <add>, %93, %cst_31 [1] : vector<16x32xf32> to vector<16xf32>
    %95 = vector.shape_cast %94 : vector<16xf32> to vector<16x1xf32>
    %cst_32 = arith.constant 3.200000e+01 : f32
    %96 = vector.broadcast %cst_32 : f32 to vector<16x1xf32>
    %97 = arith.divf %95, %96 : vector<16x1xf32>
    %98 = vector.broadcast %90 : vector<16x1xf32> to vector<16x32xf32>
    %99 = arith.subf %86, %98 : vector<16x32xf32>
    %cst_33 = arith.constant 9.99999974E-6 : f32
    %100 = vector.broadcast %cst_33 : f32 to vector<16x1xf32>
    %101 = arith.addf %97, %100 : vector<16x1xf32>
    %102 = math.rsqrt %101 : vector<16x1xf32>
    %103 = vector.broadcast %102 : vector<16x1xf32> to vector<16x32xf32>
    %104 = arith.mulf %99, %103 : vector<16x32xf32>
    %105 = vector.broadcast %11 : vector<1x32xf32> to vector<16x32xf32>
    %106 = arith.mulf %104, %105 : vector<16x32xf32>
    %107 = vector.broadcast %12 : vector<1x32xf32> to vector<16x32xf32>
    %108 = arith.addf %106, %107 : vector<16x32xf32>
    %c0_34 = arith.constant 0 : index
    %c0_35 = arith.constant 0 : index
    %109 = vector.load %arg2[%c0_34, %c0_35] : memref<16x32xf32, #tpu.memory_space<vmem>>, vector<16x32xf32>
    tpu.vector_store %arg2[%c0_34, %c0_35], %108 {strides = array<i32>} : memref<16x32xf32, #tpu.memory_space<vmem>>, vector<16x32xf32>,
    return
  }
}

</mosaic_0001>

<llo_original>
// kernel: transformer_encoder_layer.1
$region0: #{transformer_encoder_layer.1}
  #allocation0 [shape = 'u32[]', space=smem, size = 0x4, offset = 0x4, fixed_abs, tag = 'smem constant byte address 0x4 - core index']
  #allocation1 [shape = 'u32[144,128]{1,0:T(1,128)}', space=vmem, size = 0x12000, scoped, tag = 'internal scratch']
  %s0 = inlined_call_operand.vmem [shape: f32[16,32], index: 0, kind: input, shape index: {}]
  %s1 = inlined_call_operand.vmem [shape: f32[248,64], index: 1, kind: input, shape index: {}]
  %s2 = inlined_call_operand.hbm [shape: f32[16,32], index: 2, kind: output, shape index: {}]
  %s3 = sld [smem:[#allocation0]]
  $region18: #{transformer_encoder_layer.1} parent=0
    _
  %s5 = ssub.s32 1, %s3
  %s6 = scalar_select 0, %s5, %s3
  $region1: #{transformer_encoder_layer.1} parent=0
    #allocation2 [shape = 'u8[8192]{0}', space=vmem, size = 0x2000, scoped, tag = 'output window, operand 0, single buffered']
    #allocation3 [shape = 's32[1]{0}', space=sflag, size = 0x4, scoped, tag = 'scoped memory for transformer_encoder_layer.1']
    %7 = vsyncpa [#allocation3], 0
    // Predicated region
    $region2: #{transformer_encoder_layer.1} parent=1 // pred_check
      _
    $region3: #{transformer_encoder_layer.1} parent=1 // pred_check_branch
      %9 = sbr.rel (0) target = $region5
    $region4: #{transformer_encoder_layer.1} parent=1 // pred_region
      _
    $region5: #{transformer_encoder_layer.1} parent=1 // pred_fallthru
      _
    // Predicated region
    $region6: #{transformer_encoder_layer.1} parent=1 // pred_check
      _
    $region7: #{transformer_encoder_layer.1} parent=1 // pred_check_branch
      %11 = sbr.rel (0) target = $region9
    $region8: #{transformer_encoder_layer.1} parent=1 // pred_region
      _
    $region9: #{transformer_encoder_layer.1} parent=1 // pred_fallthru
      _
    %v12 = vld [vmem:[%s0] sm:$0xff]
    %v13 = vld [vmem:[%s0 + $0x8] sm:$0xff]
    %v14 = vld [vmem:[%s1] sm:$0xff]
    %v15 = vld [vmem:[%s1 + $0x8] sm:$0xff]
    %v16 = vld [vmem:[%s1 + $0x10] sm:$0xff]
    %v17 = vld [vmem:[%s1 + $0x18] sm:$0xff]
    %v18 = vld [vmem:[%s1 + $0x20] sm:$0xff]
    %v19 = vld [vmem:[%s1 + $0x28] sm:$0xff]
    %v20 = vld [vmem:[%s1 + $0x30] sm:$0xff]
    %v21 = vld [vmem:[%s1 + $0x38] sm:$0xff]
    %v22 = vld [vmem:[%s1 + $0x40] sm:$0xff]
    %v23 = vld [vmem:[%s1 + $0x48] sm:$0xff]
    %v24 = vld [vmem:[%s1 + $0x50] sm:$0xff]
    %v25 = vld [vmem:[%s1 + $0x58] sm:$0xff]
    %v26 = vld [vmem:[%s1 + $0x60] sm:$0xff]
    %v27 = vld [vmem:[%s1 + $0x68] sm:$0xff]
    %v28 = vld [vmem:[%s1 + $0x70] sm:$0xff]
    %v29 = vld [vmem:[%s1 + $0x78] sm:$0xff]
    %v30 = vld [vmem:[%s1 + $0x80] sm:$0xff]
    %v31 = vld [vmem:[%s1 + $0x88] sm:$0xff]
    %v32 = vld [vmem:[%s1 + $0x90] sm:$0xff]
    %v33 = vld [vmem:[%s1 + $0x98] sm:$0xff]
    %v34 = vld [vmem:[%s1 + $0xa0] sm:$0xff]
    %v35 = vld [vmem:[%s1 + $0xa8] sm:$0xff]
    %v36 = vld [vmem:[%s1 + $0xb0] sm:$0xff]
    %v37 = vld [vmem:[%s1 + $0xb8] sm:$0xff]
    %v38 = vld [vmem:[%s1 + $0xc0] sm:$0xff]
    %v39 = vld [vmem:[%s1 + $0xc8] sm:$0xff]
    %v40 = vld [vmem:[%s1 + $0xd0] sm:$0xff]
    %v41 = vld [vmem:[%s1 + $0xd8] sm:$0xff]
    %v42 = vld [vmem:[%s1 + $0xe0] sm:$0x1]
    %v43 = vld [vmem:[%s1 + $0xe1] sm:$0x1]
    %v44 = vld [vmem:[%s1 + $0xe2] sm:$0x1]
    %v45 = vld [vmem:[%s1 + $0xe3] sm:$0x1]
    %v46 = vld [vmem:[%s1 + $0xe4] sm:$0x1]
    %v47 = vld [vmem:[%s1 + $0xe5] sm:$0x1]
    %v48 = vld [vmem:[%s1 + $0xe6] sm:$0x1]
    %v49 = vld [vmem:[%s1 + $0xe8] sm:$0xff]
    %v50 = vld [vmem:[%s1 + $0xf0] sm:$0xff]
    %52 = vset.pattern.permute.xlu0 32
    %53 = vperm.xlu0 %52, %v14
    %v54 = vpop.permute.xlu0 %53
    %57 = vset.pattern.permute.xlu0 32
    %58 = vperm.xlu0 %57, %v15
    %v59 = vpop.permute.xlu0 %58
    %62 = vset.pattern.permute.xlu0 32
    %63 = vperm.xlu0 %62, %v16
    %v64 = vpop.permute.xlu0 %63
    %67 = vset.pattern.permute.xlu0 32
    %68 = vperm.xlu0 %67, %v17
    %v69 = vpop.permute.xlu0 %68
    %72 = vset.pattern.permute.xlu0 32
    %73 = vperm.xlu0 %72, %v18
    %v74 = vpop.permute.xlu0 %73
    %77 = vset.pattern.permute.xlu0 32
    %78 = vperm.xlu0 %77, %v19
    %v79 = vpop.permute.xlu0 %78
    %82 = vset.pattern.permute.xlu0 32
    %83 = vperm.xlu0 %82, %v20
    %v84 = vpop.permute.xlu0 %83
    %87 = vset.pattern.permute.xlu0 32
    %88 = vperm.xlu0 %87, %v21
    %v89 = vpop.permute.xlu0 %88
    %92 = vset.pattern.permute.xlu0 32
    %93 = vperm.xlu0 %92, %v22
    %v94 = vpop.permute.xlu0 %93
    %97 = vset.pattern.permute.xlu0 32
    %98 = vperm.xlu0 %97, %v23
    %v99 = vpop.permute.xlu0 %98
    %102 = vset.pattern.permute.xlu0 32
    %103 = vperm.xlu0 %102, %v24
    %v104 = vpop.permute.xlu0 %103
    %107 = vset.pattern.permute.xlu0 32
    %108 = vperm.xlu0 %107, %v25
    %v109 = vpop.permute.xlu0 %108
    %vm111 = vcmask 261120
    %v112 = vsel %vm111, %v14, 0
    %v114 = vsel %vm111, %v15, 0
    %v116 = vsel %vm111, %v16, 0
    %v118 = vsel %vm111, %v17, 0
    %v120 = vsel %vm111, %v18, 0
    %v122 = vsel %vm111, %v19, 0
    %v124 = vsel %vm111, %v20, 0
    %v126 = vsel %vm111, %v21, 0
    %v128 = vsel %vm111, %v22, 0
    %v130 = vsel %vm111, %v23, 0
    %v132 = vsel %vm111, %v24, 0
    %v134 = vsel %vm111, %v25, 0
    %v137 = vsel %vm111, %v12, 0
    %v140 = vsel %vm111, %v13, 0
    %142 = vmatprep.subr.mxu0 0.0
    %143 = vmatpush1.xpose.msra.mxu0 0.0
    %144 = vmatprep.subr.mxu0 0.0
    %145 = vmatpush1.xpose.msra.mxu0 0.0
    %146 = vmatprep.subr.mxu0 0.0
    %147 = vmatpush1.xpose.msra.mxu0 0.0
    %148 = vmatprep.subr.mxu0 0.0
    %149 = vmatpush1.xpose.msra.mxu0 0.0
    %150 = vmatprep.subr.mxu0 0.0
    %151 = vmatpush1.xpose.msra.mxu0 0.0
    %152 = vmatprep.subr.mxu0 0.0
    %153 = vmatpush1.xpose.msra.mxu0 0.0
    %154 = vmatprep.subr.mxu0 0.0
    %155 = vmatpush1.xpose.msra.mxu0 0.0
    %156 = vmatprep.subr.mxu0 0.0
    %157 = vmatpush1.xpose.msra.mxu0 0.0
    %158 = vmatprep.subr.mxu0 0.0
    %159 = vmatpush1.xpose.msra.mxu0 0.0
    %160 = vmatprep.subr.mxu0 0.0
    %161 = vmatpush1.xpose.msra.mxu0 0.0
    %162 = vmatprep.subr.mxu0 0.0
    %163 = vmatpush1.xpose.msra.mxu0 0.0
    %164 = vmatprep.subr.mxu0 0.0
    %165 = vmatpush1.xpose.msra.mxu0 0.0
    %166 = vmatprep.subr.mxu0 0.0
    %167 = vmatpush1.xpose.msra.mxu0 0.0
    %168 = vmatprep.subr.mxu0 0.0
    %169 = vmatpush1.xpose.msra.mxu0 0.0
    %170 = vmatprep.subr.mxu0 0.0
    %171 = vmatpush1.xpose.msra.mxu0 %v140
    %172 = vmatprep.subr.mxu0 0.0
    %173 = vmatpush1.xpose.msra.mxu0 %v137
    %174 = vmatprep.subr.mxu0 0.0
    %175 = vmatpush2.xpose.msra.mxu0 0.0
    %176 = vmatprep.subr.mxu0 0.0
    %177 = vmatpush2.xpose.msra.mxu0 0.0
    %178 = vmatprep.subr.mxu0 0.0
    %179 = vmatpush2.xpose.msra.mxu0 0.0
    %180 = vmatprep.subr.mxu0 0.0
    %181 = vmatpush2.xpose.msra.mxu0 0.0
    %182 = vmatprep.subr.mxu0 0.0
    %183 = vmatpush2.xpose.msra.mxu0 0.0
    %184 = vmatprep.subr.mxu0 0.0
    %185 = vmatpush2.xpose.msra.mxu0 0.0
    %186 = vmatprep.subr.mxu0 0.0
    %187 = vmatpush2.xpose.msra.mxu0 0.0
    %188 = vmatprep.subr.mxu0 0.0
    %189 = vmatpush2.xpose.msra.mxu0 0.0
    %190 = vmatprep.subr.mxu0 0.0
    %191 = vmatpush2.xpose.msra.mxu0 0.0
    %192 = vmatprep.subr.mxu0 0.0
    %193 = vmatpush2.xpose.msra.mxu0 0.0
    %194 = vmatprep.subr.mxu0 0.0
    %195 = vmatpush2.xpose.msra.mxu0 0.0
    %196 = vmatprep.subr.mxu0 0.0
    %197 = vmatpush2.xpose.msra.mxu0 0.0
    %198 = vmatprep.subr.mxu0 0.0
    %199 = vmatpush2.xpose.msra.mxu0 0.0
    %200 = vmatprep.subr.mxu0 0.0
    %201 = vmatpush2.xpose.msra.mxu0 0.0
    %202 = vmatprep.subr.mxu0 0.0
    %203 = vmatpush2.xpose.msra.mxu0 0.0
    %204 = vmatprep.subr.mxu0 0.0
    %205 = vmatpush2.xpose.msra.mxu0 0.0
    %206 = vmatprep.mubr.f32.mxu0 0.0
    %207 = vmatmul.mubr.f32.gmra.mxu0 %v112
    %v208 = vpop.f32.mrf.mxu0
    %v209 = vadd.f32 %v54, %v208
    %v210 = vpop.f32.mrf.mxu0
    %211 = vmatprep.mubr.f32.mxu0 0.0
    %212 = vmatmul.mubr.f32.gmra.mxu0 %v114
    %v213 = vpop.f32.mrf.mxu0
    %v214 = vadd.f32 %v59, %v213
    %v215 = vpop.f32.mrf.mxu0
    %216 = vmatprep.mubr.f32.mxu0 0.0
    %217 = vmatmul.mubr.f32.gmra.mxu0 %v116
    %v218 = vpop.f32.mrf.mxu0
    %v219 = vadd.f32 %v64, %v218
    %v220 = vpop.f32.mrf.mxu0
    %221 = vmatprep.mubr.f32.mxu0 0.0
    %222 = vmatmul.mubr.f32.gmra.mxu0 %v118
    %v223 = vpop.f32.mrf.mxu0
    %v224 = vadd.f32 %v69, %v223
    %v225 = vpop.f32.mrf.mxu0
    %226 = vmatprep.mubr.f32.mxu0 0.0
    %227 = vmatmul.mubr.f32.gmra.mxu0 %v120
    %v228 = vpop.f32.mrf.mxu0
    %v229 = vadd.f32 %v74, %v228
    %v230 = vpop.f32.mrf.mxu0
    %231 = vmatprep.mubr.f32.mxu0 0.0
    %232 = vmatmul.mubr.f32.gmra.mxu0 %v122
    %v233 = vpop.f32.mrf.mxu0
    %v234 = vadd.f32 %v79, %v233
    %v235 = vpop.f32.mrf.mxu0
    %236 = vmatprep.mubr.f32.mxu0 0.0
    %237 = vmatmul.mubr.f32.gmra.mxu0 %v124
    %v238 = vpop.f32.mrf.mxu0
    %v239 = vadd.f32 %v84, %v238
    %v240 = vpop.f32.mrf.mxu0
    %241 = vmatprep.mubr.f32.mxu0 0.0
    %242 = vmatmul.mubr.f32.gmra.mxu0 %v126
    %v243 = vpop.f32.mrf.mxu0
    %v244 = vadd.f32 %v89, %v243
    %v245 = vpop.f32.mrf.mxu0
    %246 = vmatprep.mubr.f32.mxu0 0.0
    %247 = vmatmul.mubr.f32.gmra.mxu0 %v128
    %v248 = vpop.f32.mrf.mxu0
    %v249 = vadd.f32 %v94, %v248
    %v250 = vpop.f32.mrf.mxu0
    %251 = vmatprep.mubr.f32.mxu0 0.0
    %252 = vmatmul.mubr.f32.gmra.mxu0 %v130
    %v253 = vpop.f32.mrf.mxu0
    %v254 = vadd.f32 %v99, %v253
    %v255 = vpop.f32.mrf.mxu0
    %256 = vmatprep.mubr.f32.mxu0 0.0
    %257 = vmatmul.mubr.f32.gmra.mxu0 %v132
    %v258 = vpop.f32.mrf.mxu0
    %v259 = vadd.f32 %v104, %v258
    %v260 = vpop.f32.mrf.mxu0
    %261 = vmatprep.mubr.f32.mxu0 0.0
    %262 = vmatmul.mubr.f32.gmra.mxu0 %v134
    %v263 = vpop.f32.mrf.mxu0
    %v264 = vadd.f32 %v109, %v263
    %v265 = vpop.f32.mrf.mxu0
    %266 = vdwg.mxu0
    %267 = vxpose.xlu0.b32.start [1/16] %v209, 128
    %268 = vxpose.xlu0.b32.cont [2/16] %v214, 128
    %269 = vxpose.xlu0.b32.cont [3/16] %v219, 128
    %270 = vxpose.xlu0.b32.cont [4/16] %v224, 128
    %271 = vxpose.xlu0.b32.cont [5/16] 0.0, 128
    %272 = vxpose.xlu0.b32.cont [6/16] 0.0, 128
    %273 = vxpose.xlu0.b32.cont [7/16] 0.0, 128
    %274 = vxpose.xlu0.b32.cont [8/16] 0.0, 128
    %275 = vxpose.xlu0.b32.cont [9/16] 0.0, 128
    %276 = vxpose.xlu0.b32.cont [10/16] 0.0, 128
    %277 = vxpose.xlu0.b32.cont [11/16] 0.0, 128
    %278 = vxpose.xlu0.b32.cont [12/16] 0.0, 128
    %279 = vxpose.xlu0.b32.cont [13/16] 0.0, 128
    %280 = vxpose.xlu0.b32.cont [14/16] 0.0, 128
    %281 = vxpose.xlu0.b32.cont [15/16] 0.0, 128
    %282 = vxpose.xlu0.b32.end [16/16] 0.0, 128
    %v283 = vpop.trf.xlu0
    %v284 = vpop.trf.xlu0
    %v285 = vpop.trf.xlu0
    %v286 = vpop.trf.xlu0
    %v287 = vpop.trf.xlu0
    %v288 = vpop.trf.xlu0
    %v289 = vpop.trf.xlu0
    %v290 = vpop.trf.xlu0
    %v291 = vpop.trf.xlu0
    %v292 = vpop.trf.xlu0
    %v293 = vpop.trf.xlu0
    %v294 = vpop.trf.xlu0
    %v295 = vpop.trf.xlu0
    %v296 = vpop.trf.xlu0
    %v297 = vpop.trf.xlu0
    %v298 = vpop.trf.xlu0
    %301 = vrot.lane.b32.xlu0 %v283, 120
    %v302 = vpop.permute.xlu0 %301
    %303 = vrot.lane.b32.xlu0 %v284, 120
    %v304 = vpop.permute.xlu0 %303
    %305 = vrot.lane.b32.xlu0 %v283, 112
    %v306 = vpop.permute.xlu0 %305
    %307 = vrot.lane.b32.xlu0 %v284, 112
    %v308 = vpop.permute.xlu0 %307
    %309 = vrot.lane.b32.xlu0 %v283, 104
    %v310 = vpop.permute.xlu0 %309
    %311 = vrot.lane.b32.xlu0 %v284, 104
    %v312 = vpop.permute.xlu0 %311
    %vm313 = vcmask 64512
    %v314 = vsel %vm313, %v283, 0
    %v316 = vsel %vm313, %v284, 0
    %318 = vmatprep.subr.mxu0 0.0
    %319 = vmatpush1.msra.mxu0 0.0
    %320 = vmatprep.subr.mxu0 0.0
    %321 = vmatpush1.msra.mxu0 0.0
    %322 = vmatprep.subr.mxu0 0.0
    %323 = vmatpush1.msra.mxu0 0.0
    %324 = vmatprep.subr.mxu0 0.0
    %325 = vmatpush1.msra.mxu0 0.0
    %326 = vmatprep.subr.mxu0 0.0
    %327 = vmatpush1.msra.mxu0 0.0
    %328 = vmatprep.subr.mxu0 0.0
    %329 = vmatpush1.msra.mxu0 0.0
    %330 = vmatprep.subr.mxu0 0.0
    %331 = vmatpush1.msra.mxu0 0.0
    %332 = vmatprep.subr.mxu0 0.0
    %333 = vmatpush1.msra.mxu0 0.0
    %334 = vmatprep.subr.mxu0 0.0
    %335 = vmatpush1.msra.mxu0 0.0
    %336 = vmatprep.subr.mxu0 0.0
    %337 = vmatpush1.msra.mxu0 0.0
    %338 = vmatprep.subr.mxu0 0.0
    %339 = vmatpush1.msra.mxu0 0.0
    %340 = vmatprep.subr.mxu0 0.0
    %341 = vmatpush1.msra.mxu0 0.0
    %342 = vmatprep.subr.mxu0 0.0
    %343 = vmatpush1.msra.mxu0 0.0
    %344 = vmatprep.subr.mxu0 0.0
    %345 = vmatpush1.msra.mxu0 0.0
    %346 = vmatprep.subr.mxu0 0.0
    %347 = vmatpush1.msra.mxu0 0.0
    %348 = vmatprep.subr.mxu0 0.0
    %349 = vmatpush1.msra.mxu0 %v229
    %350 = vmatprep.subr.mxu0 0.0
    %351 = vmatpush2.msra.mxu0 0.0
    %352 = vmatprep.subr.mxu0 0.0
    %353 = vmatpush2.msra.mxu0 0.0
    %354 = vmatprep.subr.mxu0 0.0
    %355 = vmatpush2.msra.mxu0 0.0
    %356 = vmatprep.subr.mxu0 0.0
    %357 = vmatpush2.msra.mxu0 0.0
    %358 = vmatprep.subr.mxu0 0.0
    %359 = vmatpush2.msra.mxu0 0.0
    %360 = vmatprep.subr.mxu0 0.0
    %361 = vmatpush2.msra.mxu0 0.0
    %362 = vmatprep.subr.mxu0 0.0
    %363 = vmatpush2.msra.mxu0 0.0
    %364 = vmatprep.subr.mxu0 0.0
    %365 = vmatpush2.msra.mxu0 0.0
    %366 = vmatprep.subr.mxu0 0.0
    %367 = vmatpush2.msra.mxu0 0.0
    %368 = vmatprep.subr.mxu0 0.0
    %369 = vmatpush2.msra.mxu0 0.0
    %370 = vmatprep.subr.mxu0 0.0
    %371 = vmatpush2.msra.mxu0 0.0
    %372 = vmatprep.subr.mxu0 0.0
    %373 = vmatpush2.msra.mxu0 0.0
    %374 = vmatprep.subr.mxu0 0.0
    %375 = vmatpush2.msra.mxu0 0.0
    %376 = vmatprep.subr.mxu0 0.0
    %377 = vmatpush2.msra.mxu0 0.0
    %378 = vmatprep.subr.mxu0 0.0
    %379 = vmatpush2.msra.mxu0 0.0
    %380 = vmatprep.subr.mxu0 0.0
    %381 = vmatpush2.msra.mxu0 0.0
    %382 = vmatprep.mubr.f32.mxu0 0.0
    %383 = vmatmul.mubr.f32.gmra.mxu0 %v314
    %v384 = vpop.f32.mrf.mxu0
    %v385 = vadd.f32 0.0, %v384
    %v386 = vpop.f32.mrf.mxu0
    %387 = vmatprep.mubr.f32.mxu0 0.0
    %388 = vmatmul.mubr.f32.gmra.mxu0 %v316
    %v389 = vpop.f32.mrf.mxu0
    %v390 = vadd.f32 0.0, %v389
    %v391 = vpop.f32.mrf.mxu0
    %392 = vdwg.mxu0
    %v393 = vsel %vm313, %v302, 0
    %v395 = vsel %vm313, %v304, 0
    %397 = vmatprep.subr.mxu0 0.0
    %398 = vmatpush1.msra.mxu0 0.0
    %399 = vmatprep.subr.mxu0 0.0
    %400 = vmatpush1.msra.mxu0 0.0
    %401 = vmatprep.subr.mxu0 0.0
    %402 = vmatpush1.msra.mxu0 0.0
    %403 = vmatprep.subr.mxu0 0.0
    %404 = vmatpush1.msra.mxu0 0.0
    %405 = vmatprep.subr.mxu0 0.0
    %406 = vmatpush1.msra.mxu0 0.0
    %407 = vmatprep.subr.mxu0 0.0
    %408 = vmatpush1.msra.mxu0 0.0
    %409 = vmatprep.subr.mxu0 0.0
    %410 = vmatpush1.msra.mxu0 0.0
    %411 = vmatprep.subr.mxu0 0.0
    %412 = vmatpush1.msra.mxu0 0.0
    %413 = vmatprep.subr.mxu0 0.0
    %414 = vmatpush1.msra.mxu0 0.0
    %415 = vmatprep.subr.mxu0 0.0
    %416 = vmatpush1.msra.mxu0 0.0
    %417 = vmatprep.subr.mxu0 0.0
    %418 = vmatpush1.msra.mxu0 0.0
    %419 = vmatprep.subr.mxu0 0.0
    %420 = vmatpush1.msra.mxu0 0.0
    %421 = vmatprep.subr.mxu0 0.0
    %422 = vmatpush1.msra.mxu0 0.0
    %423 = vmatprep.subr.mxu0 0.0
    %424 = vmatpush1.msra.mxu0 0.0
    %425 = vmatprep.subr.mxu0 0.0
    %426 = vmatpush1.msra.mxu0 0.0
    %427 = vmatprep.subr.mxu0 0.0
    %428 = vmatpush1.msra.mxu0 %v234
    %429 = vmatprep.subr.mxu0 0.0
    %430 = vmatpush2.msra.mxu0 0.0
    %431 = vmatprep.subr.mxu0 0.0
    %432 = vmatpush2.msra.mxu0 0.0
    %433 = vmatprep.subr.mxu0 0.0
    %434 = vmatpush2.msra.mxu0 0.0
    %435 = vmatprep.subr.mxu0 0.0
    %436 = vmatpush2.msra.mxu0 0.0
    %437 = vmatprep.subr.mxu0 0.0
    %438 = vmatpush2.msra.mxu0 0.0
    %439 = vmatprep.subr.mxu0 0.0
    %440 = vmatpush2.msra.mxu0 0.0
    %441 = vmatprep.subr.mxu0 0.0
    %442 = vmatpush2.msra.mxu0 0.0
    %443 = vmatprep.subr.mxu0 0.0
    %444 = vmatpush2.msra.mxu0 0.0
    %445 = vmatprep.subr.mxu0 0.0
    %446 = vmatpush2.msra.mxu0 0.0
    %447 = vmatprep.subr.mxu0 0.0
    %448 = vmatpush2.msra.mxu0 0.0
    %449 = vmatprep.subr.mxu0 0.0
    %450 = vmatpush2.msra.mxu0 0.0
    %451 = vmatprep.subr.mxu0 0.0
    %452 = vmatpush2.msra.mxu0 0.0
    %453 = vmatprep.subr.mxu0 0.0
    %454 = vmatpush2.msra.mxu0 0.0
    %455 = vmatprep.subr.mxu0 0.0
    %456 = vmatpush2.msra.mxu0 0.0
    %457 = vmatprep.subr.mxu0 0.0
    %458 = vmatpush2.msra.mxu0 0.0
    %459 = vmatprep.subr.mxu0 0.0
    %460 = vmatpush2.msra.mxu0 0.0
    %461 = vmatprep.mubr.f32.mxu0 0.0
    %462 = vmatmul.mubr.f32.gmra.mxu0 %v393
    %v463 = vpop.f32.mrf.mxu0
    %v464 = vadd.f32 0.0, %v463
    %v465 = vpop.f32.mrf.mxu0
    %466 = vmatprep.mubr.f32.mxu0 0.0
    %467 = vmatmul.mubr.f32.gmra.mxu0 %v395
    %v468 = vpop.f32.mrf.mxu0
    %v469 = vadd.f32 0.0, %v468
    %v470 = vpop.f32.mrf.mxu0
    %471 = vdwg.mxu0
    %v472 = vsel %vm313, %v306, 0
    %v474 = vsel %vm313, %v308, 0
    %476 = vmatprep.subr.mxu0 0.0
    %477 = vmatpush1.msra.mxu0 0.0
    %478 = vmatprep.subr.mxu0 0.0
    %479 = vmatpush1.msra.mxu0 0.0
    %480 = vmatprep.subr.mxu0 0.0
    %481 = vmatpush1.msra.mxu0 0.0
    %482 = vmatprep.subr.mxu0 0.0
    %483 = vmatpush1.msra.mxu0 0.0
    %484 = vmatprep.subr.mxu0 0.0
    %485 = vmatpush1.msra.mxu0 0.0
    %486 = vmatprep.subr.mxu0 0.0
    %487 = vmatpush1.msra.mxu0 0.0
    %488 = vmatprep.subr.mxu0 0.0
    %489 = vmatpush1.msra.mxu0 0.0
    %490 = vmatprep.subr.mxu0 0.0
    %491 = vmatpush1.msra.mxu0 0.0
    %492 = vmatprep.subr.mxu0 0.0
    %493 = vmatpush1.msra.mxu0 0.0
    %494 = vmatprep.subr.mxu0 0.0
    %495 = vmatpush1.msra.mxu0 0.0
    %496 = vmatprep.subr.mxu0 0.0
    %497 = vmatpush1.msra.mxu0 0.0
    %498 = vmatprep.subr.mxu0 0.0
    %499 = vmatpush1.msra.mxu0 0.0
    %500 = vmatprep.subr.mxu0 0.0
    %501 = vmatpush1.msra.mxu0 0.0
    %502 = vmatprep.subr.mxu0 0.0
    %503 = vmatpush1.msra.mxu0 0.0
    %504 = vmatprep.subr.mxu0 0.0
    %505 = vmatpush1.msra.mxu0 0.0
    %506 = vmatprep.subr.mxu0 0.0
    %507 = vmatpush1.msra.mxu0 %v239
    %508 = vmatprep.subr.mxu0 0.0
    %509 = vmatpush2.msra.mxu0 0.0
    %510 = vmatprep.subr.mxu0 0.0
    %511 = vmatpush2.msra.mxu0 0.0
    %512 = vmatprep.subr.mxu0 0.0
    %513 = vmatpush2.msra.mxu0 0.0
    %514 = vmatprep.subr.mxu0 0.0
    %515 = vmatpush2.msra.mxu0 0.0
    %516 = vmatprep.subr.mxu0 0.0
    %517 = vmatpush2.msra.mxu0 0.0
    %518 = vmatprep.subr.mxu0 0.0
    %519 = vmatpush2.msra.mxu0 0.0
    %520 = vmatprep.subr.mxu0 0.0
    %521 = vmatpush2.msra.mxu0 0.0
    %522 = vmatprep.subr.mxu0 0.0
    %523 = vmatpush2.msra.mxu0 0.0
    %524 = vmatprep.subr.mxu0 0.0
    %525 = vmatpush2.msra.mxu0 0.0
    %526 = vmatprep.subr.mxu0 0.0
    %527 = vmatpush2.msra.mxu0 0.0
    %528 = vmatprep.subr.mxu0 0.0
    %529 = vmatpush2.msra.mxu0 0.0
    %530 = vmatprep.subr.mxu0 0.0
    %531 = vmatpush2.msra.mxu0 0.0
    %532 = vmatprep.subr.mxu0 0.0
    %533 = vmatpush2.msra.mxu0 0.0
    %534 = vmatprep.subr.mxu0 0.0
    %535 = vmatpush2.msra.mxu0 0.0
    %536 = vmatprep.subr.mxu0 0.0
    %537 = vmatpush2.msra.mxu0 0.0
    %538 = vmatprep.subr.mxu0 0.0
    %539 = vmatpush2.msra.mxu0 0.0
    %540 = vmatprep.mubr.f32.mxu0 0.0
    %541 = vmatmul.mubr.f32.gmra.mxu0 %v472
    %v542 = vpop.f32.mrf.mxu0
    %v543 = vadd.f32 0.0, %v542
    %v544 = vpop.f32.mrf.mxu0
    %545 = vmatprep.mubr.f32.mxu0 0.0
    %546 = vmatmul.mubr.f32.gmra.mxu0 %v474
    %v547 = vpop.f32.mrf.mxu0
    %v548 = vadd.f32 0.0, %v547
    %v549 = vpop.f32.mrf.mxu0
    %550 = vdwg.mxu0
    %v551 = vsel %vm313, %v310, 0
    %v553 = vsel %vm313, %v312, 0
    %555 = vmatprep.subr.mxu0 0.0
    %556 = vmatpush1.msra.mxu0 0.0
    %557 = vmatprep.subr.mxu0 0.0
    %558 = vmatpush1.msra.mxu0 0.0
    %559 = vmatprep.subr.mxu0 0.0
    %560 = vmatpush1.msra.mxu0 0.0
    %561 = vmatprep.subr.mxu0 0.0
    %562 = vmatpush1.msra.mxu0 0.0
    %563 = vmatprep.subr.mxu0 0.0
    %564 = vmatpush1.msra.mxu0 0.0
    %565 = vmatprep.subr.mxu0 0.0
    %566 = vmatpush1.msra.mxu0 0.0
    %567 = vmatprep.subr.mxu0 0.0
    %568 = vmatpush1.msra.mxu0 0.0
    %569 = vmatprep.subr.mxu0 0.0
    %570 = vmatpush1.msra.mxu0 0.0
    %571 = vmatprep.subr.mxu0 0.0
    %572 = vmatpush1.msra.mxu0 0.0
    %573 = vmatprep.subr.mxu0 0.0
    %574 = vmatpush1.msra.mxu0 0.0
    %575 = vmatprep.subr.mxu0 0.0
    %576 = vmatpush1.msra.mxu0 0.0
    %577 = vmatprep.subr.mxu0 0.0
    %578 = vmatpush1.msra.mxu0 0.0
    %579 = vmatprep.subr.mxu0 0.0
    %580 = vmatpush1.msra.mxu0 0.0
    %581 = vmatprep.subr.mxu0 0.0
    %582 = vmatpush1.msra.mxu0 0.0
    %583 = vmatprep.subr.mxu0 0.0
    %584 = vmatpush1.msra.mxu0 0.0
    %585 = vmatprep.subr.mxu0 0.0
    %586 = vmatpush1.msra.mxu0 %v244
    %587 = vmatprep.subr.mxu0 0.0
    %588 = vmatpush2.msra.mxu0 0.0
    %589 = vmatprep.subr.mxu0 0.0
    %590 = vmatpush2.msra.mxu0 0.0
    %591 = vmatprep.subr.mxu0 0.0
    %592 = vmatpush2.msra.mxu0 0.0
    %593 = vmatprep.subr.mxu0 0.0
    %594 = vmatpush2.msra.mxu0 0.0
    %595 = vmatprep.subr.mxu0 0.0
    %596 = vmatpush2.msra.mxu0 0.0
    %597 = vmatprep.subr.mxu0 0.0
    %598 = vmatpush2.msra.mxu0 0.0
    %599 = vmatprep.subr.mxu0 0.0
    %600 = vmatpush2.msra.mxu0 0.0
    %601 = vmatprep.subr.mxu0 0.0
    %602 = vmatpush2.msra.mxu0 0.0
    %603 = vmatprep.subr.mxu0 0.0
    %604 = vmatpush2.msra.mxu0 0.0
    %605 = vmatprep.subr.mxu0 0.0
    %606 = vmatpush2.msra.mxu0 0.0
    %607 = vmatprep.subr.mxu0 0.0
    %608 = vmatpush2.msra.mxu0 0.0
    %609 = vmatprep.subr.mxu0 0.0
    %610 = vmatpush2.msra.mxu0 0.0
    %611 = vmatprep.subr.mxu0 0.0
    %612 = vmatpush2.msra.mxu0 0.0
    %613 = vmatprep.subr.mxu0 0.0
    %614 = vmatpush2.msra.mxu0 0.0
    %615 = vmatprep.subr.mxu0 0.0
    %616 = vmatpush2.msra.mxu0 0.0
    %617 = vmatprep.subr.mxu0 0.0
    %618 = vmatpush2.msra.mxu0 0.0
    %619 = vmatprep.mubr.f32.mxu0 0.0
    %620 = vmatmul.mubr.f32.gmra.mxu0 %v551
    %v621 = vpop.f32.mrf.mxu0
    %v622 = vadd.f32 0.0, %v621
    %v623 = vpop.f32.mrf.mxu0
    %624 = vmatprep.mubr.f32.mxu0 0.0
    %625 = vmatmul.mubr.f32.gmra.mxu0 %v553
    %v626 = vpop.f32.mrf.mxu0
    %v627 = vadd.f32 0.0, %v626
    %v628 = vpop.f32.mrf.mxu0
    %629 = vdwg.mxu0
    %v630 = vmul.f32 %v385, 0.35355338
    %v631 = vmul.f32 %v390, 0.35355338
    %v632 = vmul.f32 %v464, 0.35355338
    %v633 = vmul.f32 %v469, 0.35355338
    %v634 = vmul.f32 %v543, 0.35355338
    %v635 = vmul.f32 %v548, 0.35355338
    %v636 = vmul.f32 %v622, 0.35355338
    %v637 = vmul.f32 %v627, 0.35355338
    %v638 = vadd.f32 %v630, %v49
    %v639 = vadd.f32 %v631, %v50
    %v640 = vadd.f32 %v632, %v49
    %v641 = vadd.f32 %v633, %v50
    %v642 = vadd.f32 %v634, %v49
    %v643 = vadd.f32 %v635, %v50
    %v644 = vadd.f32 %v636, %v49
    %v645 = vadd.f32 %v637, %v50
    %vm646 = vcmask 130048
    %v647 = vsel %vm646, %v638, -inf
    %648 = vmax.xlane.f32.xlu0 %v647
    %v649 = vpop.xlane.xlu0 %648
    %v650 = vsel %vm646, %v639, -inf
    %651 = vmax.xlane.f32.xlu0 %v650
    %v652 = vpop.xlane.xlu0 %651
    %v653 = vsel %vm646, %v640, -inf
    %654 = vmax.xlane.f32.xlu0 %v653
    %v655 = vpop.xlane.xlu0 %654
    %v656 = vsel %vm646, %v641, -inf
    %657 = vmax.xlane.f32.xlu0 %v656
    %v658 = vpop.xlane.xlu0 %657
    %v659 = vsel %vm646, %v642, -inf
    %660 = vmax.xlane.f32.xlu0 %v659
    %v661 = vpop.xlane.xlu0 %660
    %v662 = vsel %vm646, %v643, -inf
    %663 = vmax.xlane.f32.xlu0 %v662
    %v664 = vpop.xlane.xlu0 %663
    %v665 = vsel %vm646, %v644, -inf
    %666 = vmax.xlane.f32.xlu0 %v665
    %v667 = vpop.xlane.xlu0 %666
    %v668 = vsel %vm646, %v645, -inf
    %669 = vmax.xlane.f32.xlu0 %v668
    %v670 = vpop.xlane.xlu0 %669
    %v671 = vsub.f32 %v638, %v649
    %v672 = vsub.f32 %v639, %v652
    %v673 = vsub.f32 %v640, %v655
    %v674 = vsub.f32 %v641, %v658
    %v675 = vsub.f32 %v642, %v661
    %v676 = vsub.f32 %v643, %v664
    %v677 = vsub.f32 %v644, %v667
    %v678 = vsub.f32 %v645, %v670
    %v679 = vmul.f32 %v671, 1.442695
    %v680 = vpow.pop %v679
    %v681 = vmul.f32 %v672, 1.442695
    %v682 = vpow.pop %v681
    %v683 = vmul.f32 %v673, 1.442695
    %v684 = vpow.pop %v683
    %v685 = vmul.f32 %v674, 1.442695
    %v686 = vpow.pop %v685
    %v687 = vmul.f32 %v675, 1.442695
    %v688 = vpow.pop %v687
    %v689 = vmul.f32 %v676, 1.442695
    %v690 = vpow.pop %v689
    %v691 = vmul.f32 %v677, 1.442695
    %v692 = vpow.pop %v691
    %v693 = vmul.f32 %v678, 1.442695
    %v694 = vpow.pop %v693
    %v695 = vsel %vm646, %v680, 0.0
    %696 = vadd.xlane.f32.xlu0 %v695
    %v697 = vpop.xlane.xlu0 %696
    %v698 = vsel %vm646, %v682, 0.0
    %699 = vadd.xlane.f32.xlu0 %v698
    %v700 = vpop.xlane.xlu0 %699
    %v701 = vsel %vm646, %v684, 0.0
    %702 = vadd.xlane.f32.xlu0 %v701
    %v703 = vpop.xlane.xlu0 %702
    %v704 = vsel %vm646, %v686, 0.0
    %705 = vadd.xlane.f32.xlu0 %v704
    %v706 = vpop.xlane.xlu0 %705
    %v707 = vsel %vm646, %v688, 0.0
    %708 = vadd.xlane.f32.xlu0 %v707
    %v709 = vpop.xlane.xlu0 %708
    %v710 = vsel %vm646, %v690, 0.0
    %711 = vadd.xlane.f32.xlu0 %v710
    %v712 = vpop.xlane.xlu0 %711
    %v713 = vsel %vm646, %v692, 0.0
    %714 = vadd.xlane.f32.xlu0 %v713
    %v715 = vpop.xlane.xlu0 %714
    %v716 = vsel %vm646, %v694, 0.0
    %717 = vadd.xlane.f32.xlu0 %v716
    %v718 = vpop.xlane.xlu0 %717
    %v719 = vrcp.pop %v697
    %v720 = vrcp.pop %v700
    %v721 = vrcp.pop %v703
    %v722 = vrcp.pop %v706
    %v723 = vrcp.pop %v709
    %v724 = vrcp.pop %v712
    %v725 = vrcp.pop %v715
    %v726 = vrcp.pop %v718
    %v727 = vmul.f32 %v680, %v719
    %v728 = vmul.f32 %v682, %v720
    %v729 = vmul.f32 %v684, %v721
    %v730 = vmul.f32 %v686, %v722
    %v731 = vmul.f32 %v688, %v723
    %v732 = vmul.f32 %v690, %v724
    %v733 = vmul.f32 %v692, %v725
    %v734 = vmul.f32 %v694, %v726
    %v736 = vsel %vm646, %v249, 0
    %v739 = vsel %vm646, %v727, 0
    %v742 = vsel %vm646, %v728, 0
    %744 = vmatprep.subr.mxu0 0.0
    %745 = vmatpush1.xpose.msra.mxu0 0.0
    %746 = vmatprep.subr.mxu0 0.0
    %747 = vmatpush1.xpose.msra.mxu0 0.0
    %748 = vmatprep.subr.mxu0 0.0
    %749 = vmatpush1.xpose.msra.mxu0 0.0
    %750 = vmatprep.subr.mxu0 0.0
    %751 = vmatpush1.xpose.msra.mxu0 0.0
    %752 = vmatprep.subr.mxu0 0.0
    %753 = vmatpush1.xpose.msra.mxu0 0.0
    %754 = vmatprep.subr.mxu0 0.0
    %755 = vmatpush1.xpose.msra.mxu0 0.0
    %756 = vmatprep.subr.mxu0 0.0
    %757 = vmatpush1.xpose.msra.mxu0 0.0
    %758 = vmatprep.subr.mxu0 0.0
    %759 = vmatpush1.xpose.msra.mxu0 0.0
    %760 = vmatprep.subr.mxu0 0.0
    %761 = vmatpush1.xpose.msra.mxu0 0.0
    %762 = vmatprep.subr.mxu0 0.0
    %763 = vmatpush1.xpose.msra.mxu0 0.0
    %764 = vmatprep.subr.mxu0 0.0
    %765 = vmatpush1.xpose.msra.mxu0 0.0
    %766 = vmatprep.subr.mxu0 0.0
    %767 = vmatpush1.xpose.msra.mxu0 0.0
    %768 = vmatprep.subr.mxu0 0.0
    %769 = vmatpush1.xpose.msra.mxu0 0.0
    %770 = vmatprep.subr.mxu0 0.0
    %771 = vmatpush1.xpose.msra.mxu0 0.0
    %772 = vmatprep.subr.mxu0 0.0
    %773 = vmatpush1.xpose.msra.mxu0 %v742
    %774 = vmatprep.subr.mxu0 0.0
    %775 = vmatpush1.xpose.msra.mxu0 %v739
    %776 = vmatprep.subr.mxu0 0.0
    %777 = vmatpush2.xpose.msra.mxu0 0.0
    %778 = vmatprep.subr.mxu0 0.0
    %779 = vmatpush2.xpose.msra.mxu0 0.0
    %780 = vmatprep.subr.mxu0 0.0
    %781 = vmatpush2.xpose.msra.mxu0 0.0
    %782 = vmatprep.subr.mxu0 0.0
    %783 = vmatpush2.xpose.msra.mxu0 0.0
    %784 = vmatprep.subr.mxu0 0.0
    %785 = vmatpush2.xpose.msra.mxu0 0.0
    %786 = vmatprep.subr.mxu0 0.0
    %787 = vmatpush2.xpose.msra.mxu0 0.0
    %788 = vmatprep.subr.mxu0 0.0
    %789 = vmatpush2.xpose.msra.mxu0 0.0
    %790 = vmatprep.subr.mxu0 0.0
    %791 = vmatpush2.xpose.msra.mxu0 0.0
    %792 = vmatprep.subr.mxu0 0.0
    %793 = vmatpush2.xpose.msra.mxu0 0.0
    %794 = vmatprep.subr.mxu0 0.0
    %795 = vmatpush2.xpose.msra.mxu0 0.0
    %796 = vmatprep.subr.mxu0 0.0
    %797 = vmatpush2.xpose.msra.mxu0 0.0
    %798 = vmatprep.subr.mxu0 0.0
    %799 = vmatpush2.xpose.msra.mxu0 0.0
    %800 = vmatprep.subr.mxu0 0.0
    %801 = vmatpush2.xpose.msra.mxu0 0.0
    %802 = vmatprep.subr.mxu0 0.0
    %803 = vmatpush2.xpose.msra.mxu0 0.0
    %804 = vmatprep.subr.mxu0 0.0
    %805 = vmatpush2.xpose.msra.mxu0 0.0
    %806 = vmatprep.subr.mxu0 0.0
    %807 = vmatpush2.xpose.msra.mxu0 0.0
    %808 = vmatprep.mubr.f32.mxu0 0.0
    %809 = vmatmul.mubr.f32.gmra.mxu0 %v736
    %v810 = vpop.f32.mrf.mxu0
    %v811 = vadd.f32 0.0, %v810
    %v812 = vpop.f32.mrf.mxu0
    %813 = vdwg.mxu0
    %v815 = vsel %vm646, %v254, 0
    %v818 = vsel %vm646, %v729, 0
    %v821 = vsel %vm646, %v730, 0
    %823 = vmatprep.subr.mxu0 0.0
    %824 = vmatpush1.xpose.msra.mxu0 0.0
    %825 = vmatprep.subr.mxu0 0.0
    %826 = vmatpush1.xpose.msra.mxu0 0.0
    %827 = vmatprep.subr.mxu0 0.0
    %828 = vmatpush1.xpose.msra.mxu0 0.0
    %829 = vmatprep.subr.mxu0 0.0
    %830 = vmatpush1.xpose.msra.mxu0 0.0
    %831 = vmatprep.subr.mxu0 0.0
    %832 = vmatpush1.xpose.msra.mxu0 0.0
    %833 = vmatprep.subr.mxu0 0.0
    %834 = vmatpush1.xpose.msra.mxu0 0.0
    %835 = vmatprep.subr.mxu0 0.0
    %836 = vmatpush1.xpose.msra.mxu0 0.0
    %837 = vmatprep.subr.mxu0 0.0
    %838 = vmatpush1.xpose.msra.mxu0 0.0
    %839 = vmatprep.subr.mxu0 0.0
    %840 = vmatpush1.xpose.msra.mxu0 0.0
    %841 = vmatprep.subr.mxu0 0.0
    %842 = vmatpush1.xpose.msra.mxu0 0.0
    %843 = vmatprep.subr.mxu0 0.0
    %844 = vmatpush1.xpose.msra.mxu0 0.0
    %845 = vmatprep.subr.mxu0 0.0
    %846 = vmatpush1.xpose.msra.mxu0 0.0
    %847 = vmatprep.subr.mxu0 0.0
    %848 = vmatpush1.xpose.msra.mxu0 0.0
    %849 = vmatprep.subr.mxu0 0.0
    %850 = vmatpush1.xpose.msra.mxu0 0.0
    %851 = vmatprep.subr.mxu0 0.0
    %852 = vmatpush1.xpose.msra.mxu0 %v821
    %853 = vmatprep.subr.mxu0 0.0
    %854 = vmatpush1.xpose.msra.mxu0 %v818
    %855 = vmatprep.subr.mxu0 0.0
    %856 = vmatpush2.xpose.msra.mxu0 0.0
    %857 = vmatprep.subr.mxu0 0.0
    %858 = vmatpush2.xpose.msra.mxu0 0.0
    %859 = vmatprep.subr.mxu0 0.0
    %860 = vmatpush2.xpose.msra.mxu0 0.0
    %861 = vmatprep.subr.mxu0 0.0
    %862 = vmatpush2.xpose.msra.mxu0 0.0
    %863 = vmatprep.subr.mxu0 0.0
    %864 = vmatpush2.xpose.msra.mxu0 0.0
    %865 = vmatprep.subr.mxu0 0.0
    %866 = vmatpush2.xpose.msra.mxu0 0.0
    %867 = vmatprep.subr.mxu0 0.0
    %868 = vmatpush2.xpose.msra.mxu0 0.0
    %869 = vmatprep.subr.mxu0 0.0
    %870 = vmatpush2.xpose.msra.mxu0 0.0
    %871 = vmatprep.subr.mxu0 0.0
    %872 = vmatpush2.xpose.msra.mxu0 0.0
    %873 = vmatprep.subr.mxu0 0.0
    %874 = vmatpush2.xpose.msra.mxu0 0.0
    %875 = vmatprep.subr.mxu0 0.0
    %876 = vmatpush2.xpose.msra.mxu0 0.0
    %877 = vmatprep.subr.mxu0 0.0
    %878 = vmatpush2.xpose.msra.mxu0 0.0
    %879 = vmatprep.subr.mxu0 0.0
    %880 = vmatpush2.xpose.msra.mxu0 0.0
    %881 = vmatprep.subr.mxu0 0.0
    %882 = vmatpush2.xpose.msra.mxu0 0.0
    %883 = vmatprep.subr.mxu0 0.0
    %884 = vmatpush2.xpose.msra.mxu0 0.0
    %885 = vmatprep.subr.mxu0 0.0
    %886 = vmatpush2.xpose.msra.mxu0 0.0
    %887 = vmatprep.mubr.f32.mxu0 0.0
    %888 = vmatmul.mubr.f32.gmra.mxu0 %v815
    %v889 = vpop.f32.mrf.mxu0
    %v890 = vadd.f32 0.0, %v889
    %v891 = vpop.f32.mrf.mxu0
    %892 = vdwg.mxu0
    %v894 = vsel %vm646, %v259, 0
    %v897 = vsel %vm646, %v731, 0
    %v900 = vsel %vm646, %v732, 0
    %902 = vmatprep.subr.mxu0 0.0
    %903 = vmatpush1.xpose.msra.mxu0 0.0
    %904 = vmatprep.subr.mxu0 0.0
    %905 = vmatpush1.xpose.msra.mxu0 0.0
    %906 = vmatprep.subr.mxu0 0.0
    %907 = vmatpush1.xpose.msra.mxu0 0.0
    %908 = vmatprep.subr.mxu0 0.0
    %909 = vmatpush1.xpose.msra.mxu0 0.0
    %910 = vmatprep.subr.mxu0 0.0
    %911 = vmatpush1.xpose.msra.mxu0 0.0
    %912 = vmatprep.subr.mxu0 0.0
    %913 = vmatpush1.xpose.msra.mxu0 0.0
    %914 = vmatprep.subr.mxu0 0.0
    %915 = vmatpush1.xpose.msra.mxu0 0.0
    %916 = vmatprep.subr.mxu0 0.0
    %917 = vmatpush1.xpose.msra.mxu0 0.0
    %918 = vmatprep.subr.mxu0 0.0
    %919 = vmatpush1.xpose.msra.mxu0 0.0
    %920 = vmatprep.subr.mxu0 0.0
    %921 = vmatpush1.xpose.msra.mxu0 0.0
    %922 = vmatprep.subr.mxu0 0.0
    %923 = vmatpush1.xpose.msra.mxu0 0.0
    %924 = vmatprep.subr.mxu0 0.0
    %925 = vmatpush1.xpose.msra.mxu0 0.0
    %926 = vmatprep.subr.mxu0 0.0
    %927 = vmatpush1.xpose.msra.mxu0 0.0
    %928 = vmatprep.subr.mxu0 0.0
    %929 = vmatpush1.xpose.msra.mxu0 0.0
    %930 = vmatprep.subr.mxu0 0.0
    %931 = vmatpush1.xpose.msra.mxu0 %v900
    %932 = vmatprep.subr.mxu0 0.0
    %933 = vmatpush1.xpose.msra.mxu0 %v897
    %934 = vmatprep.subr.mxu0 0.0
    %935 = vmatpush2.xpose.msra.mxu0 0.0
    %936 = vmatprep.subr.mxu0 0.0
    %937 = vmatpush2.xpose.msra.mxu0 0.0
    %938 = vmatprep.subr.mxu0 0.0
    %939 = vmatpush2.xpose.msra.mxu0 0.0
    %940 = vmatprep.subr.mxu0 0.0
    %941 = vmatpush2.xpose.msra.mxu0 0.0
    %942 = vmatprep.subr.mxu0 0.0
    %943 = vmatpush2.xpose.msra.mxu0 0.0
    %944 = vmatprep.subr.mxu0 0.0
    %945 = vmatpush2.xpose.msra.mxu0 0.0
    %946 = vmatprep.subr.mxu0 0.0
    %947 = vmatpush2.xpose.msra.mxu0 0.0
    %948 = vmatprep.subr.mxu0 0.0
    %949 = vmatpush2.xpose.msra.mxu0 0.0
    %950 = vmatprep.subr.mxu0 0.0
    %951 = vmatpush2.xpose.msra.mxu0 0.0
    %952 = vmatprep.subr.mxu0 0.0
    %953 = vmatpush2.xpose.msra.mxu0 0.0
    %954 = vmatprep.subr.mxu0 0.0
    %955 = vmatpush2.xpose.msra.mxu0 0.0
    %956 = vmatprep.subr.mxu0 0.0
    %957 = vmatpush2.xpose.msra.mxu0 0.0
    %958 = vmatprep.subr.mxu0 0.0
    %959 = vmatpush2.xpose.msra.mxu0 0.0
    %960 = vmatprep.subr.mxu0 0.0
    %961 = vmatpush2.xpose.msra.mxu0 0.0
    %962 = vmatprep.subr.mxu0 0.0
    %963 = vmatpush2.xpose.msra.mxu0 0.0
    %964 = vmatprep.subr.mxu0 0.0
    %965 = vmatpush2.xpose.msra.mxu0 0.0
    %966 = vmatprep.mubr.f32.mxu0 0.0
    %967 = vmatmul.mubr.f32.gmra.mxu0 %v894
    %v968 = vpop.f32.mrf.mxu0
    %v969 = vadd.f32 0.0, %v968
    %v970 = vpop.f32.mrf.mxu0
    %971 = vdwg.mxu0
    %v973 = vsel %vm646, %v264, 0
    %v976 = vsel %vm646, %v733, 0
    %v979 = vsel %vm646, %v734, 0
    %981 = vmatprep.subr.mxu0 0.0
    %982 = vmatpush1.xpose.msra.mxu0 0.0
    %983 = vmatprep.subr.mxu0 0.0
    %984 = vmatpush1.xpose.msra.mxu0 0.0
    %985 = vmatprep.subr.mxu0 0.0
    %986 = vmatpush1.xpose.msra.mxu0 0.0
    %987 = vmatprep.subr.mxu0 0.0
    %988 = vmatpush1.xpose.msra.mxu0 0.0
    %989 = vmatprep.subr.mxu0 0.0
    %990 = vmatpush1.xpose.msra.mxu0 0.0
    %991 = vmatprep.subr.mxu0 0.0
    %992 = vmatpush1.xpose.msra.mxu0 0.0
    %993 = vmatprep.subr.mxu0 0.0
    %994 = vmatpush1.xpose.msra.mxu0 0.0
    %995 = vmatprep.subr.mxu0 0.0
    %996 = vmatpush1.xpose.msra.mxu0 0.0
    %997 = vmatprep.subr.mxu0 0.0
    %998 = vmatpush1.xpose.msra.mxu0 0.0
    %999 = vmatprep.subr.mxu0 0.0
    %1000 = vmatpush1.xpose.msra.mxu0 0.0
    %1001 = vmatprep.subr.mxu0 0.0
    %1002 = vmatpush1.xpose.msra.mxu0 0.0
    %1003 = vmatprep.subr.mxu0 0.0
    %1004 = vmatpush1.xpose.msra.mxu0 0.0
    %1005 = vmatprep.subr.mxu0 0.0
    %1006 = vmatpush1.xpose.msra.mxu0 0.0
    %1007 = vmatprep.subr.mxu0 0.0
    %1008 = vmatpush1.xpose.msra.mxu0 0.0
    %1009 = vmatprep.subr.mxu0 0.0
    %1010 = vmatpush1.xpose.msra.mxu0 %v979
    %1011 = vmatprep.subr.mxu0 0.0
    %1012 = vmatpush1.xpose.msra.mxu0 %v976
    %1013 = vmatprep.subr.mxu0 0.0
    %1014 = vmatpush2.xpose.msra.mxu0 0.0
    %1015 = vmatprep.subr.mxu0 0.0
    %1016 = vmatpush2.xpose.msra.mxu0 0.0
    %1017 = vmatprep.subr.mxu0 0.0
    %1018 = vmatpush2.xpose.msra.mxu0 0.0
    %1019 = vmatprep.subr.mxu0 0.0
    %1020 = vmatpush2.xpose.msra.mxu0 0.0
    %1021 = vmatprep.subr.mxu0 0.0
    %1022 = vmatpush2.xpose.msra.mxu0 0.0
    %1023 = vmatprep.subr.mxu0 0.0
    %1024 = vmatpush2.xpose.msra.mxu0 0.0
    %1025 = vmatprep.subr.mxu0 0.0
    %1026 = vmatpush2.xpose.msra.mxu0 0.0
    %1027 = vmatprep.subr.mxu0 0.0
    %1028 = vmatpush2.xpose.msra.mxu0 0.0
    %1029 = vmatprep.subr.mxu0 0.0
    %1030 = vmatpush2.xpose.msra.mxu0 0.0
    %1031 = vmatprep.subr.mxu0 0.0
    %1032 = vmatpush2.xpose.msra.mxu0 0.0
    %1033 = vmatprep.subr.mxu0 0.0
    %1034 = vmatpush2.xpose.msra.mxu0 0.0
    %1035 = vmatprep.subr.mxu0 0.0
    %1036 = vmatpush2.xpose.msra.mxu0 0.0
    %1037 = vmatprep.subr.mxu0 0.0
    %1038 = vmatpush2.xpose.msra.mxu0 0.0
    %1039 = vmatprep.subr.mxu0 0.0
    %1040 = vmatpush2.xpose.msra.mxu0 0.0
    %1041 = vmatprep.subr.mxu0 0.0
    %1042 = vmatpush2.xpose.msra.mxu0 0.0
    %1043 = vmatprep.subr.mxu0 0.0
    %1044 = vmatpush2.xpose.msra.mxu0 0.0
    %1045 = vmatprep.mubr.f32.mxu0 0.0
    %1046 = vmatmul.mubr.f32.gmra.mxu0 %v973
    %v1047 = vpop.f32.mrf.mxu0
    %v1048 = vadd.f32 0.0, %v1047
    %v1049 = vpop.f32.mrf.mxu0
    %1050 = vdwg.mxu0
    %v1052 = vsel %vm111, %v26, 0
    %v1055 = vsel %vm111, %v27, 0
    %v1058 = vsel %vm111, %v28, 0
    %v1061 = vsel %vm111, %v29, 0
    %1063 = vmatprep.subr.mxu0 0.0
    %1064 = vmatpush1.msra.mxu0 0.0
    %1065 = vmatprep.subr.mxu0 0.0
    %1066 = vmatpush1.msra.mxu0 0.0
    %1067 = vmatprep.subr.mxu0 0.0
    %1068 = vmatpush1.msra.mxu0 0.0
    %1069 = vmatprep.subr.mxu0 0.0
    %1070 = vmatpush1.msra.mxu0 0.0
    %1071 = vmatprep.subr.mxu0 0.0
    %1072 = vmatpush1.msra.mxu0 0.0
    %1073 = vmatprep.subr.mxu0 0.0
    %1074 = vmatpush1.msra.mxu0 0.0
    %1075 = vmatprep.subr.mxu0 0.0
    %1076 = vmatpush1.msra.mxu0 0.0
    %1077 = vmatprep.subr.mxu0 0.0
    %1078 = vmatpush1.msra.mxu0 0.0
    %1079 = vmatprep.subr.mxu0 0.0
    %1080 = vmatpush1.msra.mxu0 0.0
    %1081 = vmatprep.subr.mxu0 0.0
    %1082 = vmatpush1.msra.mxu0 0.0
    %1083 = vmatprep.subr.mxu0 0.0
    %1084 = vmatpush1.msra.mxu0 0.0
    %1085 = vmatprep.subr.mxu0 0.0
    %1086 = vmatpush1.msra.mxu0 0.0
    %1087 = vmatprep.subr.mxu0 0.0
    %1088 = vmatpush1.msra.mxu0 %v1048
    %1089 = vmatprep.subr.mxu0 0.0
    %1090 = vmatpush1.msra.mxu0 %v969
    %1091 = vmatprep.subr.mxu0 0.0
    %1092 = vmatpush1.msra.mxu0 %v890
    %1093 = vmatprep.subr.mxu0 0.0
    %1094 = vmatpush1.msra.mxu0 %v811
    %1095 = vmatprep.subr.mxu0 0.0
    %1096 = vmatpush2.msra.mxu0 0.0
    %1097 = vmatprep.subr.mxu0 0.0
    %1098 = vmatpush2.msra.mxu0 0.0
    %1099 = vmatprep.subr.mxu0 0.0
    %1100 = vmatpush2.msra.mxu0 0.0
    %1101 = vmatprep.subr.mxu0 0.0
    %1102 = vmatpush2.msra.mxu0 0.0
    %1103 = vmatprep.subr.mxu0 0.0
    %1104 = vmatpush2.msra.mxu0 0.0
    %1105 = vmatprep.subr.mxu0 0.0
    %1106 = vmatpush2.msra.mxu0 0.0
    %1107 = vmatprep.subr.mxu0 0.0
    %1108 = vmatpush2.msra.mxu0 0.0
    %1109 = vmatprep.subr.mxu0 0.0
    %1110 = vmatpush2.msra.mxu0 0.0
    %1111 = vmatprep.subr.mxu0 0.0
    %1112 = vmatpush2.msra.mxu0 0.0
    %1113 = vmatprep.subr.mxu0 0.0
    %1114 = vmatpush2.msra.mxu0 0.0
    %1115 = vmatprep.subr.mxu0 0.0
    %1116 = vmatpush2.msra.mxu0 0.0
    %1117 = vmatprep.subr.mxu0 0.0
    %1118 = vmatpush2.msra.mxu0 0.0
    %1119 = vmatprep.subr.mxu0 0.0
    %1120 = vmatpush2.msra.mxu0 0.0
    %1121 = vmatprep.subr.mxu0 0.0
    %1122 = vmatpush2.msra.mxu0 0.0
    %1123 = vmatprep.subr.mxu0 0.0
    %1124 = vmatpush2.msra.mxu0 0.0
    %1125 = vmatprep.subr.mxu0 0.0
    %1126 = vmatpush2.msra.mxu0 0.0
    %1127 = vmatprep.mubr.f32.mxu0 0.0
    %1128 = vmatmul.mubr.f32.gmra.mxu0 %v1052
    %v1129 = vpop.f32.mrf.mxu0
    %v1130 = vadd.f32 0.0, %v1129
    %v1131 = vpop.f32.mrf.mxu0
    %1132 = vmatprep.mubr.f32.mxu0 0.0
    %1133 = vmatmul.mubr.f32.gmra.mxu0 %v1055
    %v1134 = vpop.f32.mrf.mxu0
    %v1135 = vadd.f32 0.0, %v1134
    %v1136 = vpop.f32.mrf.mxu0
    %1137 = vmatprep.mubr.f32.mxu0 0.0
    %1138 = vmatmul.mubr.f32.gmra.mxu0 %v1058
    %v1139 = vpop.f32.mrf.mxu0
    %v1140 = vadd.f32 0.0, %v1139
    %v1141 = vpop.f32.mrf.mxu0
    %1142 = vmatprep.mubr.f32.mxu0 0.0
    %1143 = vmatmul.mubr.f32.gmra.mxu0 %v1061
    %v1144 = vpop.f32.mrf.mxu0
    %v1145 = vadd.f32 0.0, %v1144
    %v1146 = vpop.f32.mrf.mxu0
    %1147 = vdwg.mxu0
    %1148 = vxpose.xlu0.b32.start [1/16] %v1130, 128
    %1149 = vxpose.xlu0.b32.cont [2/16] %v1135, 128
    %1150 = vxpose.xlu0.b32.cont [3/16] %v1140, 128
    %1151 = vxpose.xlu0.b32.cont [4/16] %v1145, 128
    %1152 = vxpose.xlu0.b32.cont [5/16] 0.0, 128
    %1153 = vxpose.xlu0.b32.cont [6/16] 0.0, 128
    %1154 = vxpose.xlu0.b32.cont [7/16] 0.0, 128
    %1155 = vxpose.xlu0.b32.cont [8/16] 0.0, 128
    %1156 = vxpose.xlu0.b32.cont [9/16] 0.0, 128
    %1157 = vxpose.xlu0.b32.cont [10/16] 0.0, 128
    %1158 = vxpose.xlu0.b32.cont [11/16] 0.0, 128
    %1159 = vxpose.xlu0.b32.cont [12/16] 0.0, 128
    %1160 = vxpose.xlu0.b32.cont [13/16] 0.0, 128
    %1161 = vxpose.xlu0.b32.cont [14/16] 0.0, 128
    %1162 = vxpose.xlu0.b32.cont [15/16] 0.0, 128
    %1163 = vxpose.xlu0.b32.end [16/16] 0.0, 128
    %v1164 = vpop.trf.xlu0
    %v1165 = vpop.trf.xlu0
    %v1166 = vpop.trf.xlu0
    %v1167 = vpop.trf.xlu0
    %v1168 = vpop.trf.xlu0
    %v1169 = vpop.trf.xlu0
    %v1170 = vpop.trf.xlu0
    %v1171 = vpop.trf.xlu0
    %v1172 = vpop.trf.xlu0
    %v1173 = vpop.trf.xlu0
    %v1174 = vpop.trf.xlu0
    %v1175 = vpop.trf.xlu0
    %v1176 = vpop.trf.xlu0
    %v1177 = vpop.trf.xlu0
    %v1178 = vpop.trf.xlu0
    %v1179 = vpop.trf.xlu0
    %v1180 = vlaneseq
    %v1181 = vshrl.u32 %v1180, 7
    %v1182 = vsub.s32 0, %v1181
    %v1183 = vrot.slane %v42, %v1182
    %v1184 = vadd.f32 %v1164, %v1183
    %v1185 = vadd.f32 %v1165, %v1183
    %v1186 = vadd.f32 %v12, %v1184
    %v1187 = vadd.f32 %v13, %v1185
    %v1188 = vsel %vm111, %v1186, 0.0
    %1189 = vadd.xlane.f32.xlu0 %v1188
    %v1190 = vpop.xlane.xlu0 %1189
    %v1191 = vsel %vm111, %v1187, 0.0
    %1192 = vadd.xlane.f32.xlu0 %v1191
    %v1193 = vpop.xlane.xlu0 %1192
    %v1194 = vrcp.pop 32.0
    %v1195 = vmul.f32 %v1190, %v1194
    %v1196 = vmul.f32 %v1193, %v1194
    %v1197 = vsub.f32 %v1186, %v1195
    %v1198 = vsub.f32 %v1187, %v1196
    %v1199 = vmul.f32 %v1197, %v1197
    %v1200 = vmul.f32 %v1198, %v1198
    %v1201 = vsel %vm111, %v1199, 0.0
    %1202 = vadd.xlane.f32.xlu0 %v1201
    %v1203 = vpop.xlane.xlu0 %1202
    %v1204 = vsel %vm111, %v1200, 0.0
    %1205 = vadd.xlane.f32.xlu0 %v1204
    %v1206 = vpop.xlane.xlu0 %1205
    %v1207 = vmul.f32 %v1203, %v1194
    %v1208 = vmul.f32 %v1206, %v1194
    %v1209 = vadd.f32 %v1207, 1e-05
    %v1210 = vadd.f32 %v1208, 1e-05
    %v1211 = vrsqrt.pop %v1209
    %v1212 = vrsqrt.pop %v1210
    %v1213 = vmul.f32 %v1197, %v1211
    %v1214 = vmul.f32 %v1198, %v1212
    %v1215 = vlaneseq
    %v1216 = vshrl.u32 %v1215, 7
    %v1217 = vsub.s32 0, %v1216
    %v1218 = vrot.slane %v45, %v1217
    %v1219 = vmul.f32 %v1213, %v1218
    %v1220 = vmul.f32 %v1214, %v1218
    %v1221 = vlaneseq
    %v1222 = vshrl.u32 %v1221, 7
    %v1223 = vsub.s32 0, %v1222
    %v1224 = vrot.slane %v46, %v1223
    %v1225 = vadd.f32 %v1219, %v1224
    %v1226 = vadd.f32 %v1220, %v1224
    %v1227 = vlaneseq
    %v1228 = vshrl.u32 %v1227, 7
    %v1229 = vsub.s32 0, %v1228
    %v1230 = vrot.slane %v43, %v1229
    %v1232 = vsel %vm111, %v1225, 0
    %v1235 = vsel %vm111, %v1226, 0
    %1237 = vmatprep.subr.mxu0 0.0
    %1238 = vmatpush1.msra.mxu0 0.0
    %1239 = vmatprep.subr.mxu0 0.0
    %1240 = vmatpush1.msra.mxu0 0.0
    %1241 = vmatprep.subr.mxu0 0.0
    %1242 = vmatpush1.msra.mxu0 0.0
    %1243 = vmatprep.subr.mxu0 0.0
    %1244 = vmatpush1.msra.mxu0 0.0
    %1245 = vmatprep.subr.mxu0 0.0
    %1246 = vmatpush1.msra.mxu0 0.0
    %1247 = vmatprep.subr.mxu0 0.0
    %1248 = vmatpush1.msra.mxu0 0.0
    %1249 = vmatprep.subr.mxu0 0.0
    %1250 = vmatpush1.msra.mxu0 0.0
    %1251 = vmatprep.subr.mxu0 0.0
    %1252 = vmatpush1.msra.mxu0 0.0
    %1253 = vmatprep.subr.mxu0 0.0
    %1254 = vmatpush1.msra.mxu0 0.0
    %1255 = vmatprep.subr.mxu0 0.0
    %1256 = vmatpush1.msra.mxu0 0.0
    %1257 = vmatprep.subr.mxu0 0.0
    %1258 = vmatpush1.msra.mxu0 0.0
    %1259 = vmatprep.subr.mxu0 0.0
    %1260 = vmatpush1.msra.mxu0 0.0
    %1261 = vmatprep.subr.mxu0 0.0
    %1262 = vmatpush1.msra.mxu0 %v33
    %1263 = vmatprep.subr.mxu0 0.0
    %1264 = vmatpush1.msra.mxu0 %v32
    %1265 = vmatprep.subr.mxu0 0.0
    %1266 = vmatpush1.msra.mxu0 %v31
    %1267 = vmatprep.subr.mxu0 0.0
    %1268 = vmatpush1.msra.mxu0 %v30
    %1269 = vmatprep.subr.mxu0 0.0
    %1270 = vmatpush2.msra.mxu0 0.0
    %1271 = vmatprep.subr.mxu0 0.0
    %1272 = vmatpush2.msra.mxu0 0.0
    %1273 = vmatprep.subr.mxu0 0.0
    %1274 = vmatpush2.msra.mxu0 0.0
    %1275 = vmatprep.subr.mxu0 0.0
    %1276 = vmatpush2.msra.mxu0 0.0
    %1277 = vmatprep.subr.mxu0 0.0
    %1278 = vmatpush2.msra.mxu0 0.0
    %1279 = vmatprep.subr.mxu0 0.0
    %1280 = vmatpush2.msra.mxu0 0.0
    %1281 = vmatprep.subr.mxu0 0.0
    %1282 = vmatpush2.msra.mxu0 0.0
    %1283 = vmatprep.subr.mxu0 0.0
    %1284 = vmatpush2.msra.mxu0 0.0
    %1285 = vmatprep.subr.mxu0 0.0
    %1286 = vmatpush2.msra.mxu0 0.0
    %1287 = vmatprep.subr.mxu0 0.0
    %1288 = vmatpush2.msra.mxu0 0.0
    %1289 = vmatprep.subr.mxu0 0.0
    %1290 = vmatpush2.msra.mxu0 0.0
    %1291 = vmatprep.subr.mxu0 0.0
    %1292 = vmatpush2.msra.mxu0 0.0
    %1293 = vmatprep.subr.mxu0 0.0
    %1294 = vmatpush2.msra.mxu0 0.0
    %1295 = vmatprep.subr.mxu0 0.0
    %1296 = vmatpush2.msra.mxu0 0.0
    %1297 = vmatprep.subr.mxu0 0.0
    %1298 = vmatpush2.msra.mxu0 0.0
    %1299 = vmatprep.subr.mxu0 0.0
    %1300 = vmatpush2.msra.mxu0 0.0
    %1301 = vmatprep.mubr.f32.mxu0 0.0
    %1302 = vmatmul.mubr.f32.gmra.mxu0 %v1232
    %v1303 = vpop.f32.mrf.mxu0
    %v1304 = vadd.f32 %v1230, %v1303
    %v1305 = vpop.f32.mrf.mxu0
    %1306 = vmatprep.mubr.f32.mxu0 0.0
    %1307 = vmatmul.mubr.f32.gmra.mxu0 %v1235
    %v1308 = vpop.f32.mrf.mxu0
    %v1309 = vadd.f32 %v1230, %v1308
    %v1310 = vpop.f32.mrf.mxu0
    %1311 = vdwg.mxu0
    %v1312 = vmax.f32 %v1304, 0.0
    %v1313 = vmax.f32 %v1309, 0.0
    %v1314 = vlaneseq
    %v1315 = vshrl.u32 %v1314, 7
    %v1316 = vsub.s32 0, %v1315
    %v1317 = vrot.slane %v44, %v1316
    %vm1318 = vcmask 523264
    %v1320 = vsel %vm1318, %v1312, 0
    %v1323 = vsel %vm1318, %v1313, 0
    %1325 = vmatprep.subr.mxu0 0.0
    %1326 = vmatpush1.msra.mxu0 0.0
    %1327 = vmatprep.subr.mxu0 0.0
    %1328 = vmatpush1.msra.mxu0 0.0
    %1329 = vmatprep.subr.mxu0 0.0
    %1330 = vmatpush1.msra.mxu0 0.0
    %1331 = vmatprep.subr.mxu0 0.0
    %1332 = vmatpush1.msra.mxu0 0.0
    %1333 = vmatprep.subr.mxu0 0.0
    %1334 = vmatpush1.msra.mxu0 0.0
    %1335 = vmatprep.subr.mxu0 0.0
    %1336 = vmatpush1.msra.mxu0 0.0
    %1337 = vmatprep.subr.mxu0 0.0
    %1338 = vmatpush1.msra.mxu0 0.0
    %1339 = vmatprep.subr.mxu0 0.0
    %1340 = vmatpush1.msra.mxu0 0.0
    %1341 = vmatprep.subr.mxu0 0.0
    %1342 = vmatpush1.msra.mxu0 %v41
    %1343 = vmatprep.subr.mxu0 0.0
    %1344 = vmatpush1.msra.mxu0 %v40
    %1345 = vmatprep.subr.mxu0 0.0
    %1346 = vmatpush1.msra.mxu0 %v39
    %1347 = vmatprep.subr.mxu0 0.0
    %1348 = vmatpush1.msra.mxu0 %v38
    %1349 = vmatprep.subr.mxu0 0.0
    %1350 = vmatpush1.msra.mxu0 %v37
    %1351 = vmatprep.subr.mxu0 0.0
    %1352 = vmatpush1.msra.mxu0 %v36
    %1353 = vmatprep.subr.mxu0 0.0
    %1354 = vmatpush1.msra.mxu0 %v35
    %1355 = vmatprep.subr.mxu0 0.0
    %1356 = vmatpush1.msra.mxu0 %v34
    %1357 = vmatprep.subr.mxu0 0.0
    %1358 = vmatpush2.msra.mxu0 0.0
    %1359 = vmatprep.subr.mxu0 0.0
    %1360 = vmatpush2.msra.mxu0 0.0
    %1361 = vmatprep.subr.mxu0 0.0
    %1362 = vmatpush2.msra.mxu0 0.0
    %1363 = vmatprep.subr.mxu0 0.0
    %1364 = vmatpush2.msra.mxu0 0.0
    %1365 = vmatprep.subr.mxu0 0.0
    %1366 = vmatpush2.msra.mxu0 0.0
    %1367 = vmatprep.subr.mxu0 0.0
    %1368 = vmatpush2.msra.mxu0 0.0
    %1369 = vmatprep.subr.mxu0 0.0
    %1370 = vmatpush2.msra.mxu0 0.0
    %1371 = vmatprep.subr.mxu0 0.0
    %1372 = vmatpush2.msra.mxu0 0.0
    %1373 = vmatprep.subr.mxu0 0.0
    %1374 = vmatpush2.msra.mxu0 0.0
    %1375 = vmatprep.subr.mxu0 0.0
    %1376 = vmatpush2.msra.mxu0 0.0
    %1377 = vmatprep.subr.mxu0 0.0
    %1378 = vmatpush2.msra.mxu0 0.0
    %1379 = vmatprep.subr.mxu0 0.0
    %1380 = vmatpush2.msra.mxu0 0.0
    %1381 = vmatprep.subr.mxu0 0.0
    %1382 = vmatpush2.msra.mxu0 0.0
    %1383 = vmatprep.subr.mxu0 0.0
    %1384 = vmatpush2.msra.mxu0 0.0
    %1385 = vmatprep.subr.mxu0 0.0
    %1386 = vmatpush2.msra.mxu0 0.0
    %1387 = vmatprep.subr.mxu0 0.0
    %1388 = vmatpush2.msra.mxu0 0.0
    %1389 = vmatprep.mubr.f32.mxu0 0.0
    %1390 = vmatmul.mubr.f32.gmra.mxu0 %v1320
    %v1391 = vpop.f32.mrf.mxu0
    %v1392 = vadd.f32 %v1317, %v1391
    %v1393 = vpop.f32.mrf.mxu0
    %1394 = vmatprep.mubr.f32.mxu0 0.0
    %1395 = vmatmul.mubr.f32.gmra.mxu0 %v1323
    %v1396 = vpop.f32.mrf.mxu0
    %v1397 = vadd.f32 %v1317, %v1396
    %v1398 = vpop.f32.mrf.mxu0
    %1399 = vdwg.mxu0
    %v1400 = vadd.f32 %v1225, %v1392
    %v1401 = vadd.f32 %v1226, %v1397
    %v1402 = vsel %vm111, %v1400, 0.0
    %1403 = vadd.xlane.f32.xlu0 %v1402
    %v1404 = vpop.xlane.xlu0 %1403
    %v1405 = vsel %vm111, %v1401, 0.0
    %1406 = vadd.xlane.f32.xlu0 %v1405
    %v1407 = vpop.xlane.xlu0 %1406
    %v1408 = vmul.f32 %v1404, %v1194
    %v1409 = vmul.f32 %v1407, %v1194
    %v1410 = vsub.f32 %v1400, %v1408
    %v1411 = vsub.f32 %v1401, %v1409
    %v1412 = vmul.f32 %v1410, %v1410
    %v1413 = vmul.f32 %v1411, %v1411
    %v1414 = vsel %vm111, %v1412, 0.0
    %1415 = vadd.xlane.f32.xlu0 %v1414
    %v1416 = vpop.xlane.xlu0 %1415
    %v1417 = vsel %vm111, %v1413, 0.0
    %1418 = vadd.xlane.f32.xlu0 %v1417
    %v1419 = vpop.xlane.xlu0 %1418
    %v1420 = vmul.f32 %v1416, %v1194
    %v1421 = vmul.f32 %v1419, %v1194
    %v1422 = vadd.f32 %v1420, 1e-05
    %v1423 = vadd.f32 %v1421, 1e-05
    %v1424 = vrsqrt.pop %v1422
    %v1425 = vrsqrt.pop %v1423
    %v1426 = vmul.f32 %v1410, %v1424
    %v1427 = vmul.f32 %v1411, %v1425
    %v1428 = vlaneseq
    %v1429 = vshrl.u32 %v1428, 7
    %v1430 = vsub.s32 0, %v1429
    %v1431 = vrot.slane %v47, %v1430
    %v1432 = vmul.f32 %v1426, %v1431
    %v1433 = vmul.f32 %v1427, %v1431
    %v1434 = vlaneseq
    %v1435 = vshrl.u32 %v1434, 7
    %v1436 = vsub.s32 0, %v1435
    %v1437 = vrot.slane %v48, %v1436
    %v1438 = vadd.f32 %v1432, %v1437
    %v1439 = vadd.f32 %v1433, %v1437
    %1440 = vst.msk [vmem:[#allocation2] sm:$0xff] %vm111, %v1438
    %1441 = vst.msk [vmem:[#allocation2 + $0x8] sm:$0xff] %vm111, %v1439
    // Predicated region
    $region10: #{transformer_encoder_layer.1} parent=1 // pred_check
      _
    $region11: #{transformer_encoder_layer.1} parent=1 // pred_check_branch
      %1443 = sbr.rel (0) target = $region13
    $region12: #{transformer_encoder_layer.1} parent=1 // pred_region
      %s1445 = ssub.s32 256, 256
      %1446 = vsyncadd [#allocation3], %s1445
      %s1447 = sshll.u32 [#allocation2], 4
      %s1448 = int_to_ptr.vmem [resolvable:$true] %s1447
      %1453 = dma.vmem_to_hbm [thread:$0]  %s1448, 256, %s2, [#allocation3], 128, 128, 8
    $region13: #{transformer_encoder_layer.1} parent=1 // pred_fallthru
      _
    // Predicated region
    $region14: #{transformer_encoder_layer.1} parent=1 // pred_check
      _
    $region15: #{transformer_encoder_layer.1} parent=1 // pred_check_branch
      %1455 = sbr.rel (0) target = $region17
    $region16: #{transformer_encoder_layer.1} parent=1 // pred_region
      %1456 = dma.done [#allocation3], 256
    $region17: #{transformer_encoder_layer.1} parent=1 // pred_fallthru
      _
    %1457 = vsyncpa [#allocation3], 1

</llo_original>
